<compile_context>
chip_gen: v5e
topology: v5e:2x2
jax: 0.10.0
libtpu: 0.0.40
codegen_flags: <defaults>
</compile_context>

<pallas_src>
import functools
import math

import jax
import jax.numpy as jnp
from jax.experimental import pallas as pl
from jax.experimental.pallas import tpu as pltpu


# ----------------------------------------------------------------------------
# Fused encoder + latent-head kernel (grid = (batch, layer))
# ----------------------------------------------------------------------------
def _encoder_kernel(
    # inputs
    x_emb_ref, kmask_ref, embg_ref, embb_ref,
    wqkv_ref, bqkv_ref, wo_ref, bo_ref, ln1g_ref, ln1b_ref,
    w1_ref, b1_ref, w2_ref, b2_ref, ln2g_ref, ln2b_ref,
    poolg_ref, poolb_ref, latw_ref,
    # output (packed: [pooled | latent])
    out_ref,
    # scratch
    x_scratch, ctx_scratch,
    *, num_heads, head_dim, eps, scale, hidden, latent_dim,
):
    layer = pl.program_id(1)

    def layernorm(v, g, b):
        mu = jnp.mean(v, axis=-1, keepdims=True)
        var = jnp.mean(jnp.square(v - mu), axis=-1, keepdims=True)
        return (v - mu) * jax.lax.rsqrt(var + eps) * g + b

    # ---- embedding LayerNorm fused in at layer 0; result stays in VMEM ----
    @pl.when(layer == 0)
    def _():
        x_scratch[...] = layernorm(x_emb_ref[...], embg_ref[...], embb_ref[...])

    x = x_scratch[...]                                        # (S, H) f32 resident
    # additive key-padding mask built in-kernel from a (1, S) vector
    add_mask = jnp.where(kmask_ref[...] > 0.0, 0.0, -1e9)    # (1, S) f32

    # ---- self-attention: fused QKV matmul (bf16 operands, f32 acc) ----
    x_bf = x.astype(jnp.bfloat16)
    qkv = jnp.dot(x_bf, wqkv_ref[...], preferred_element_type=jnp.float32)
    qkv = qkv + bqkv_ref[...]                                 # (S, 3H) f32

    # TODO(synk): at real sizes pad head_dim to a 128-lane boundary so these
    # per-head slices are lane-aligned instead of masked sub-lane windows.
    for h in range(num_heads):                                # static unroll
        lo = h * head_dim
        q_h = (qkv[:, lo:lo + head_dim] * scale).astype(jnp.bfloat16)
        k_h = qkv[:, hidden + lo:hidden + lo + head_dim].astype(jnp.bfloat16)
        v_h = qkv[:, 2 * hidden + lo:2 * hidden + lo + head_dim].astype(jnp.bfloat16)
        s = jax.lax.dot_general(q_h, k_h, (((1,), (1,)), ((), ())),
                                preferred_element_type=jnp.float32)   # (S, S)
        s = s + add_mask
        s = s - jnp.max(s, axis=-1, keepdims=True)
        p = jnp.exp(s)
        p = p * pl.reciprocal(jnp.sum(p, axis=-1, keepdims=True), approx=True)
        ctx_h = jnp.dot(p.astype(jnp.bfloat16), v_h,
                        preferred_element_type=jnp.float32)           # (S, dh)
        # head-merge: write into lane-resident (S, H) scratch, no per-head matmul
        ctx_scratch[:, lo:lo + head_dim] = ctx_h.astype(ctx_scratch.dtype)

    # single fused output projection: (S,H) @ (H,H), K = H
    attn = jnp.dot(ctx_scratch[...], wo_ref[...],
                   preferred_element_type=jnp.float32) + bo_ref[...]
    x = layernorm(attn + x, ln1g_ref[...], ln1b_ref[...])

    # ---- feed-forward (bf16 operands, f32 accumulate, f32 elementwise) ----
    ffn = jnp.dot(x.astype(jnp.bfloat16), w1_ref[...],
                  preferred_element_type=jnp.float32) + b1_ref[...]
    # TODO(synk): HF RoBERTa uses exact (erf) GELU; tanh-approx GELU used here
    # for robust Mosaic lowering of the transcendental.
    ffn = jax.nn.gelu(ffn, approximate=True)
    ffn = jnp.dot(ffn.astype(jnp.bfloat16), w2_ref[...],
                  preferred_element_type=jnp.float32) + b2_ref[...]
    x = layernorm(ffn + x, ln2g_ref[...], ln2b_ref[...])

    x_scratch[...] = x

    # ---- latent-connector head, fused in at the last layer ----
    @pl.when(layer == pl.num_programs(1) - 1)
    def _():
        cls = x[0:1, :]                                       # CLS row, plain read
        pooled = layernorm(cls, poolg_ref[...], poolb_ref[...])      # (1, H)
        latent = jnp.dot(pooled.astype(jnp.bfloat16), latw_ref[...],
                         preferred_element_type=jnp.float32)         # (1, 2*latent)
        packed = jnp.concatenate([pooled, latent], axis=-1)          # lane-dense slab
        out_ref[0] = packed.astype(out_ref.dtype)


# ----------------------------------------------------------------------------
# Model configuration & deterministic parameter init
# ----------------------------------------------------------------------------
class Config:
    vocab_size = 100
    hidden_size = 32
    num_heads = 2
    num_layers = 2
    intermediate_size = 64
    max_position = 16
    latent_size = 16          # -> latent linear output = 2 * latent_size = 32
    layer_norm_eps = 1e-5


def init_params(key, cfg):
    H, I, L = cfg.hidden_size, cfg.intermediate_size, cfg.num_layers
    keys = iter(jax.random.split(key, 16))

    def nrm(shape, dtype=jnp.float32):
        return (0.02 * jax.random.normal(next(keys), shape)).astype(dtype)

    ones = lambda s: jnp.ones(s, jnp.float32)
    zeros = lambda s: jnp.zeros(s, jnp.float32)
    bf16 = jnp.bfloat16

    return {
        # embedding tables stay f32 (gathers are plain-JAX glue)
        "word_emb": nrm((cfg.vocab_size, H)),
        "pos_emb": nrm((cfg.max_position, H)),
        "type_emb": nrm((1, H)),
        "emb_ln_g": ones((1, H)), "emb_ln_b": zeros((1, H)),
        # per-layer matmul weights: stacked on layer axis, stored bf16
        "wqkv": nrm((L, H, 3 * H), bf16), "bqkv": zeros((L, 1, 3 * H)),
        "wo": nrm((L, H, H), bf16), "bo": zeros((L, 1, H)),
        "ln1_g": ones((L, 1, H)), "ln1_b": zeros((L, 1, H)),
        "w1": nrm((L, H, I), bf16), "b1": zeros((L, 1, I)),
        "w2": nrm((L, I, H), bf16), "b2": zeros((L, 1, H)),
        "ln2_g": ones((L, 1, H)), "ln2_b": zeros((L, 1, H)),
        # RobertaForLatentConnector head
        "pool_ln_g": ones((1, H)), "pool_ln_b": zeros((1, H)),
        "latent_w": nrm((H, 2 * cfg.latent_size), bf16),      # nn.Linear(bias=False)
    }


# ----------------------------------------------------------------------------
# Forward pass (RoBERTa encoder + latent-connector head)
# ----------------------------------------------------------------------------
def roberta_for_latent_forward(params, input_ids, attention_mask, cfg):
    B, S = input_ids.shape
    H = cfg.hidden_size
    nh = cfg.num_heads
    dh = H // nh
    L = cfg.num_layers
    I = cfg.intermediate_size
    lat = 2 * cfg.latent_size
    eps = cfg.layer_norm_eps
    scale = 1.0 / math.sqrt(dh)

    # ---- embeddings (gathers are glue in plain JAX) ----
    mask_i = attention_mask.astype(jnp.int32)
    # RoBERTa-style position ids: padding_idx(=1) + running count of non-pad tokens.
    pos_ids = jnp.cumsum(mask_i, axis=1) * mask_i + 1
    tok = jnp.take(params["word_emb"], input_ids, axis=0)        # (B,S,H)
    pos = jnp.take(params["pos_emb"], pos_ids, axis=0)           # (B,S,H)
    typ = params["type_emb"][0][None, None, :]                   # (1,1,H)
    x_emb = (tok + pos + typ).astype(jnp.float32)                # (B,S,H)
    kmask = mask_i.astype(jnp.float32).reshape(B, 1, S)          # (B,1,S)

    # index maps: grid = (batch b, layer l)
    per_batch = lambda b, l: (b, 0, 0)
    per_layer = lambda b, l: (l, 0, 0)
    const2 = lambda b, l: (0, 0)

    def batch_spec(*dims):
        return pl.BlockSpec((pl.Squeezed(),) + dims, per_batch)

    def layer_spec(*dims):
        return pl.BlockSpec((pl.Squeezed(),) + dims, per_layer)

    in_specs = [
        batch_spec(S, H),                                 # x_emb
        batch_spec(1, S),                                 # key mask vector
        pl.BlockSpec((1, H), const2),                     # emb_ln_g
        pl.BlockSpec((1, H), const2),                     # emb_ln_b
        layer_spec(H, 3 * H),                             # wqkv (bf16)
        layer_spec(1, 3 * H),                             # bqkv
        layer_spec(H, H),                                 # wo (bf16)
        layer_spec(1, H),                                 # bo
        layer_spec(1, H),                                 # ln1_g
        layer_spec(1, H),                                 # ln1_b
        layer_spec(H, I),                                 # w1 (bf16)
        layer_spec(1, I),                                 # b1
        layer_spec(I, H),                                 # w2 (bf16)
        layer_spec(1, H),                                 # b2
        layer_spec(1, H),                                 # ln2_g
        layer_spec(1, H),                                 # ln2_b
        pl.BlockSpec((1, H), const2),                     # pool_ln_g
        pl.BlockSpec((1, H), const2),                     # pool_ln_b
        pl.BlockSpec((H, lat), const2),                   # latent_w (bf16)
    ]
    # packed, lane-dense output slab: [pooled (H) | latent (2*latent_size)]
    out_specs = pl.BlockSpec((1, 1, H + lat), per_batch)
    out_shape = jax.ShapeDtypeStruct((B, 1, H + lat), jnp.float32)

    kernel = functools.partial(
        _encoder_kernel, num_heads=nh, head_dim=dh, eps=eps, scale=scale,
        hidden=H, latent_dim=lat)

    packed = pl.pallas_call(
        kernel,
        grid=(B, L),
        in_specs=in_specs,
        out_specs=out_specs,
        out_shape=out_shape,
        scratch_shapes=[
            pltpu.VMEM((S, H), jnp.float32),      # resident activations (per seq)
            pltpu.VMEM((S, H), jnp.bfloat16),     # merged head contexts
        ],
        compiler_params=pltpu.CompilerParams(
            dimension_semantics=("parallel", "arbitrary"),   # batch parallel, layers seq
            vmem_limit_bytes=32 * 1024 * 1024),
    )(
        x_emb, kmask, params["emb_ln_g"], params["emb_ln_b"],
        params["wqkv"], params["bqkv"], params["wo"], params["bo"],
        params["ln1_g"], params["ln1_b"], params["w1"], params["b1"],
        params["w2"], params["b2"], params["ln2_g"], params["ln2_b"],
        params["pool_ln_g"], params["pool_ln_b"], params["latent_w"],
    )
    packed = packed.reshape(B, H + lat)
    pooled = packed[:, :H]
    latent_params = packed[:, H:]
    return pooled, latent_params


# ----------------------------------------------------------------------------
# Main
# ----------------------------------------------------------------------------
if __name__ == "__main__":
    cfg = Config()
    key = jax.random.PRNGKey(0)
    k_param, k_ids = jax.random.split(key)

    params = init_params(k_param, cfg)

    B, S = 2, 8
    input_ids = jax.random.randint(k_ids, (B, S), 0, cfg.vocab_size, dtype=jnp.int32)
    attention_mask = jnp.ones((B, S), dtype=jnp.int32)

    fwd = jax.jit(functools.partial(roberta_for_latent_forward, cfg=cfg))
    pooled, latent_params = fwd(params, input_ids, attention_mask)
    jax.block_until_ready((pooled, latent_params))

    assert pooled.shape == (B, cfg.hidden_size)
    assert latent_params.shape == (B, 2 * cfg.latent_size)
    print("KERNEL_OK")
</pallas_src>

<mosaic_0001>
module attributes {stable_mosaic.version = 11 : i64} {
  func.func @_encoder_kernel(%arg0: i32, %arg1: i32, %arg2: memref<1x8x32xf32, #tpu.memory_space<vmem>>, %arg3: memref<1x1x8xf32, #tpu.memory_space<vmem>>, %arg4: memref<1x32xf32, #tpu.memory_space<vmem>>, %arg5: memref<1x32xf32, #tpu.memory_space<vmem>>, %arg6: memref<1x32x96xbf16, #tpu.memory_space<vmem>>, %arg7: memref<1x1x96xf32, #tpu.memory_space<vmem>>, %arg8: memref<1x32x32xbf16, #tpu.memory_space<vmem>>, %arg9: memref<1x1x32xf32, #tpu.memory_space<vmem>>, %arg10: memref<1x1x32xf32, #tpu.memory_space<vmem>>, %arg11: memref<1x1x32xf32, #tpu.memory_space<vmem>>, %arg12: memref<1x32x64xbf16, #tpu.memory_space<vmem>>, %arg13: memref<1x1x64xf32, #tpu.memory_space<vmem>>, %arg14: memref<1x64x32xbf16, #tpu.memory_space<vmem>>, %arg15: memref<1x1x32xf32, #tpu.memory_space<vmem>>, %arg16: memref<1x1x32xf32, #tpu.memory_space<vmem>>, %arg17: memref<1x1x32xf32, #tpu.memory_space<vmem>>, %arg18: memref<1x32xf32, #tpu.memory_space<vmem>>, %arg19: memref<1x32xf32, #tpu.memory_space<vmem>>, %arg20: memref<32x32xbf16, #tpu.memory_space<vmem>>, %arg21: memref<1x1x64xf32, #tpu.memory_space<vmem>>, %arg22: memref<8x32xf32, #tpu.memory_space<vmem>>, %arg23: memref<8x32xbf16, #tpu.memory_space<vmem>>) attributes {dimension_semantics = [#tpu.dimension_semantics<parallel>, #tpu.dimension_semantics<arbitrary>], iteration_bounds = array<i64: 2, 2>, scalar_prefetch = 0 : i64, scratch_operands = 2 : i64, tpu.core_type = #tpu.core_type<tc>, window_params = [{transform_indices = @transform_0, window_bounds = array<i64: 1, 8, 32>}, {transform_indices = @transform_1, window_bounds = array<i64: 1, 1, 8>}, {pipeline_mode = #tpu.pipeline_mode<synchronous>, transform_indices = @transform_2, window_bounds = array<i64: 1, 32>}, {pipeline_mode = #tpu.pipeline_mode<synchronous>, transform_indices = @transform_3, window_bounds = array<i64: 1, 32>}, {transform_indices = @transform_4, window_bounds = array<i64: 1, 32, 96>}, {transform_indices = @transform_5, window_bounds = array<i64: 1, 1, 96>}, {transform_indices = @transform_6, window_bounds = array<i64: 1, 32, 32>}, {transform_indices = @transform_7, window_bounds = array<i64: 1, 1, 32>}, {transform_indices = @transform_8, window_bounds = array<i64: 1, 1, 32>}, {transform_indices = @transform_9, window_bounds = array<i64: 1, 1, 32>}, {transform_indices = @transform_10, window_bounds = array<i64: 1, 32, 64>}, {transform_indices = @transform_11, window_bounds = array<i64: 1, 1, 64>}, {transform_indices = @transform_12, window_bounds = array<i64: 1, 64, 32>}, {transform_indices = @transform_13, window_bounds = array<i64: 1, 1, 32>}, {transform_indices = @transform_14, window_bounds = array<i64: 1, 1, 32>}, {transform_indices = @transform_15, window_bounds = array<i64: 1, 1, 32>}, {pipeline_mode = #tpu.pipeline_mode<synchronous>, transform_indices = @transform_16, window_bounds = array<i64: 1, 32>}, {pipeline_mode = #tpu.pipeline_mode<synchronous>, transform_indices = @transform_17, window_bounds = array<i64: 1, 32>}, {pipeline_mode = #tpu.pipeline_mode<synchronous>, transform_indices = @transform_18, window_bounds = array<i64: 32, 32>}, {transform_indices = @transform_19, window_bounds = array<i64: 1, 1, 64>}]} {
    %c0_i32 = arith.constant 0 : i32
    %0 = arith.cmpi eq, %arg1, %c0_i32 : i32
    %1 = arith.extui %0 : i1 to i32
    %c0_i32_0 = arith.constant 0 : i32
    %2 = arith.cmpi ne, %1, %c0_i32_0 : i32
    scf.if %2 {
      %c0_79 = arith.constant 0 : index
      %c0_80 = arith.constant 0 : index
      %c0_81 = arith.constant 0 : index
      %164 = vector.load %arg2[%c0_79, %c0_80, %c0_81] : memref<1x8x32xf32, #tpu.memory_space<vmem>>, vector<1x8x32xf32>
      %165 = vector.shape_cast %164 : vector<1x8x32xf32> to vector<8x32xf32>
      %c0_82 = arith.constant 0 : index
      %c0_83 = arith.constant 0 : index
      %166 = vector.load %arg4[%c0_82, %c0_83] : memref<1x32xf32, #tpu.memory_space<vmem>>, vector<1x32xf32>
      %c0_84 = arith.constant 0 : index
      %c0_85 = arith.constant 0 : index
      %167 = vector.load %arg5[%c0_84, %c0_85] : memref<1x32xf32, #tpu.memory_space<vmem>>, vector<1x32xf32>
      %cst_86 = arith.constant dense<0.000000e+00> : vector<8xf32>
      %168 = vector.multi_reduction <add>, %165, %cst_86 [1] : vector<8x32xf32> to vector<8xf32>
      %169 = vector.shape_cast %168 : vector<8xf32> to vector<8x1xf32>
      %cst_87 = arith.constant 3.200000e+01 : f32
      %170 = vector.broadcast %cst_87 : f32 to vector<8x1xf32>
      %171 = arith.divf %169, %170 : vector<8x1xf32>
      %172 = vector.broadcast %171 : vector<8x1xf32> to vector<8x32xf32>
      %173 = arith.subf %165, %172 : vector<8x32xf32>
      %174 = arith.mulf %173, %173 : vector<8x32xf32>
      %cst_88 = arith.constant dense<0.000000e+00> : vector<8xf32>
      %175 = vector.multi_reduction <add>, %174, %cst_88 [1] : vector<8x32xf32> to vector<8xf32>
      %176 = vector.shape_cast %175 : vector<8xf32> to vector<8x1xf32>
      %cst_89 = arith.constant 3.200000e+01 : f32
      %177 = vector.broadcast %cst_89 : f32 to vector<8x1xf32>
      %178 = arith.divf %176, %177 : vector<8x1xf32>
      %179 = vector.broadcast %171 : vector<8x1xf32> to vector<8x32xf32>
      %180 = arith.subf %165, %179 : vector<8x32xf32>
      %cst_90 = arith.constant 9.99999974E-6 : f32
      %181 = vector.broadcast %cst_90 : f32 to vector<8x1xf32>
      %182 = arith.addf %178, %181 : vector<8x1xf32>
      %183 = math.rsqrt %182 : vector<8x1xf32>
      %184 = vector.broadcast %183 : vector<8x1xf32> to vector<8x32xf32>
      %185 = arith.mulf %180, %184 : vector<8x32xf32>
      %186 = vector.broadcast %166 : vector<1x32xf32> to vector<8x32xf32>
      %187 = arith.mulf %185, %186 : vector<8x32xf32>
      %188 = vector.broadcast %167 : vector<1x32xf32> to vector<8x32xf32>
      %189 = arith.addf %187, %188 : vector<8x32xf32>
      %c0_91 = arith.constant 0 : index
      %c0_92 = arith.constant 0 : index
      %190 = vector.load %arg22[%c0_91, %c0_92] : memref<8x32xf32, #tpu.memory_space<vmem>>, vector<8x32xf32>
      tpu.vector_store %arg22[%c0_91, %c0_92], %189 {strides = array<i32>} : memref<8x32xf32, #tpu.memory_space<vmem>>, vector<8x32xf32>,
    } else {
    }
    %c0 = arith.constant 0 : index
    %c0_1 = arith.constant 0 : index
    %3 = vector.load %arg22[%c0, %c0_1] : memref<8x32xf32, #tpu.memory_space<vmem>>, vector<8x32xf32>
    %c0_2 = arith.constant 0 : index
    %c0_3 = arith.constant 0 : index
    %c0_4 = arith.constant 0 : index
    %4 = vector.load %arg3[%c0_2, %c0_3, %c0_4] : memref<1x1x8xf32, #tpu.memory_space<vmem>>, vector<1x1x8xf32>
    %5 = vector.shape_cast %4 : vector<1x1x8xf32> to vector<1x8xf32>
    %cst = arith.constant 0.000000e+00 : f32
    %6 = vector.broadcast %cst : f32 to vector<1x8xf32>
    %7 = arith.cmpf ogt, %5, %6 : vector<1x8xf32>
    %cst_5 = arith.constant 0.000000e+00 : f32
    %cst_6 = arith.constant -1.000000e+09 : f32
    %8 = vector.broadcast %cst_5 : f32 to vector<1x8xf32>
    %9 = vector.broadcast %cst_6 : f32 to vector<1x8xf32>
    %10 = arith.select %7, %8, %9 : vector<1x8xi1>, vector<1x8xf32>
    %11 = arith.truncf %3 : vector<8x32xf32> to vector<8x32xbf16>
    %c0_7 = arith.constant 0 : index
    %c0_8 = arith.constant 0 : index
    %c0_9 = arith.constant 0 : index
    %12 = vector.load %arg6[%c0_7, %c0_8, %c0_9] : memref<1x32x96xbf16, #tpu.memory_space<vmem>>, vector<1x32x96xbf16>
    %13 = vector.shape_cast %12 : vector<1x32x96xbf16> to vector<32x96xbf16>
    %cst_10 = arith.constant dense<0.000000e+00> : vector<8x96xf32>
    %14 = tpu.matmul %11, %13, %cst_10 {dimension_numbers = #tpu.dot_dimension_numbers<[1], [0], [0], [1], [0, 0, 1, 1], [], []>} : vector<8x32xbf16>, vector<32x96xbf16>, vector<8x96xf32> -> vector<8x96xf32>
    %c0_11 = arith.constant 0 : index
    %c0_12 = arith.constant 0 : index
    %c0_13 = arith.constant 0 : index
    %15 = vector.load %arg7[%c0_11, %c0_12, %c0_13] : memref<1x1x96xf32, #tpu.memory_space<vmem>>, vector<1x1x96xf32>
    %16 = vector.shape_cast %15 : vector<1x1x96xf32> to vector<1x96xf32>
    %17 = vector.broadcast %16 : vector<1x96xf32> to vector<8x96xf32>
    %18 = arith.addf %14, %17 : vector<8x96xf32>
    %19 = vector.extract_strided_slice %18 {offsets = [0, 0], sizes = [8, 16], strides = [1, 1]} : vector<8x96xf32> to vector<8x16xf32>
    %cst_14 = arith.constant 2.500000e-01 : f32
    %20 = vector.broadcast %cst_14 : f32 to vector<8x16xf32>
    %21 = arith.mulf %19, %20 : vector<8x16xf32>
    %22 = arith.truncf %21 : vector<8x16xf32> to vector<8x16xbf16>
    %23 = vector.extract_strided_slice %18 {offsets = [0, 32], sizes = [8, 16], strides = [1, 1]} : vector<8x96xf32> to vector<8x16xf32>
    %24 = arith.truncf %23 : vector<8x16xf32> to vector<8x16xbf16>
    %25 = vector.extract_strided_slice %18 {offsets = [0, 64], sizes = [8, 16], strides = [1, 1]} : vector<8x96xf32> to vector<8x16xf32>
    %26 = arith.truncf %25 : vector<8x16xf32> to vector<8x16xbf16>
    %cst_15 = arith.constant dense<0.000000e+00> : vector<8x8xf32>
    %27 = tpu.matmul %22, %24, %cst_15 {dimension_numbers = #tpu.dot_dimension_numbers<[1], [1], [0], [0], [0, 0, 1, 0], [], []>} : vector<8x16xbf16>, vector<8x16xbf16>, vector<8x8xf32> -> vector<8x8xf32>
    %28 = vector.broadcast %10 : vector<1x8xf32> to vector<8x8xf32>
    %29 = arith.addf %27, %28 : vector<8x8xf32>
    %cst_16 = arith.constant dense<0xFF800000> : vector<8xf32>
    %30 = vector.multi_reduction <maximumf>, %29, %cst_16 [1] : vector<8x8xf32> to vector<8xf32>
    %31 = vector.shape_cast %30 : vector<8xf32> to vector<8x1xf32>
    %32 = vector.broadcast %31 : vector<8x1xf32> to vector<8x8xf32>
    %33 = arith.subf %29, %32 : vector<8x8xf32>
    %34 = math.exp %33 : vector<8x8xf32>
    %cst_17 = arith.constant dense<0.000000e+00> : vector<8xf32>
    %35 = vector.multi_reduction <add>, %34, %cst_17 [1] : vector<8x8xf32> to vector<8xf32>
    %36 = vector.shape_cast %35 : vector<8xf32> to vector<8x1xf32>
    %37 = tpu.reciprocal %36 {approx = true} : vector<8x1xf32> -> vector<8x1xf32>
    %38 = vector.broadcast %37 : vector<8x1xf32> to vector<8x8xf32>
    %39 = arith.mulf %34, %38 : vector<8x8xf32>
    %40 = arith.truncf %39 : vector<8x8xf32> to vector<8x8xbf16>
    %cst_18 = arith.constant dense<0.000000e+00> : vector<8x16xf32>
    %41 = tpu.matmul %40, %26, %cst_18 {dimension_numbers = #tpu.dot_dimension_numbers<[1], [0], [0], [1], [0, 0, 1, 1], [], []>} : vector<8x8xbf16>, vector<8x16xbf16>, vector<8x16xf32> -> vector<8x16xf32>
    %42 = arith.truncf %41 : vector<8x16xf32> to vector<8x16xbf16>
    %c0_19 = arith.constant 0 : index
    %c0_20 = arith.constant 0 : index
    %43 = vector.load %arg23[%c0_19, %c0_20] : memref<8x32xbf16, #tpu.memory_space<vmem>>, vector<8x16xbf16>
    tpu.vector_store %arg23[%c0_19, %c0_20], %42 {strides = array<i32>} : memref<8x32xbf16, #tpu.memory_space<vmem>>, vector<8x16xbf16>,
    %44 = vector.extract_strided_slice %18 {offsets = [0, 16], sizes = [8, 16], strides = [1, 1]} : vector<8x96xf32> to vector<8x16xf32>
    %cst_21 = arith.constant 2.500000e-01 : f32
    %45 = vector.broadcast %cst_21 : f32 to vector<8x16xf32>
    %46 = arith.mulf %44, %45 : vector<8x16xf32>
    %47 = arith.truncf %46 : vector<8x16xf32> to vector<8x16xbf16>
    %48 = vector.extract_strided_slice %18 {offsets = [0, 48], sizes = [8, 16], strides = [1, 1]} : vector<8x96xf32> to vector<8x16xf32>
    %49 = arith.truncf %48 : vector<8x16xf32> to vector<8x16xbf16>
    %50 = vector.extract_strided_slice %18 {offsets = [0, 80], sizes = [8, 16], strides = [1, 1]} : vector<8x96xf32> to vector<8x16xf32>
    %51 = arith.truncf %50 : vector<8x16xf32> to vector<8x16xbf16>
    %cst_22 = arith.constant dense<0.000000e+00> : vector<8x8xf32>
    %52 = tpu.matmul %47, %49, %cst_22 {dimension_numbers = #tpu.dot_dimension_numbers<[1], [1], [0], [0], [0, 0, 1, 0], [], []>} : vector<8x16xbf16>, vector<8x16xbf16>, vector<8x8xf32> -> vector<8x8xf32>
    %53 = vector.broadcast %10 : vector<1x8xf32> to vector<8x8xf32>
    %54 = arith.addf %52, %53 : vector<8x8xf32>
    %cst_23 = arith.constant dense<0xFF800000> : vector<8xf32>
    %55 = vector.multi_reduction <maximumf>, %54, %cst_23 [1] : vector<8x8xf32> to vector<8xf32>
    %56 = vector.shape_cast %55 : vector<8xf32> to vector<8x1xf32>
    %57 = vector.broadcast %56 : vector<8x1xf32> to vector<8x8xf32>
    %58 = arith.subf %54, %57 : vector<8x8xf32>
    %59 = math.exp %58 : vector<8x8xf32>
    %cst_24 = arith.constant dense<0.000000e+00> : vector<8xf32>
    %60 = vector.multi_reduction <add>, %59, %cst_24 [1] : vector<8x8xf32> to vector<8xf32>
    %61 = vector.shape_cast %60 : vector<8xf32> to vector<8x1xf32>
    %62 = tpu.reciprocal %61 {approx = true} : vector<8x1xf32> -> vector<8x1xf32>
    %63 = vector.broadcast %62 : vector<8x1xf32> to vector<8x8xf32>
    %64 = arith.mulf %59, %63 : vector<8x8xf32>
    %65 = arith.truncf %64 : vector<8x8xf32> to vector<8x8xbf16>
    %cst_25 = arith.constant dense<0.000000e+00> : vector<8x16xf32>
    %66 = tpu.matmul %65, %51, %cst_25 {dimension_numbers = #tpu.dot_dimension_numbers<[1], [0], [0], [1], [0, 0, 1, 1], [], []>} : vector<8x8xbf16>, vector<8x16xbf16>, vector<8x16xf32> -> vector<8x16xf32>
    %67 = arith.truncf %66 : vector<8x16xf32> to vector<8x16xbf16>
    %c0_26 = arith.constant 0 : index
    %c16 = arith.constant 16 : index
    %68 = vector.load %arg23[%c0_26, %c16] : memref<8x32xbf16, #tpu.memory_space<vmem>>, vector<8x16xbf16>
    tpu.vector_store %arg23[%c0_26, %c16], %67 {strides = array<i32>} : memref<8x32xbf16, #tpu.memory_space<vmem>>, vector<8x16xbf16>,
    %c0_27 = arith.constant 0 : index
    %c0_28 = arith.constant 0 : index
    %69 = vector.load %arg23[%c0_27, %c0_28] : memref<8x32xbf16, #tpu.memory_space<vmem>>, vector<8x32xbf16>
    %c0_29 = arith.constant 0 : index
    %c0_30 = arith.constant 0 : index
    %c0_31 = arith.constant 0 : index
    %70 = vector.load %arg8[%c0_29, %c0_30, %c0_31] : memref<1x32x32xbf16, #tpu.memory_space<vmem>>, vector<1x32x32xbf16>
    %71 = vector.shape_cast %70 : vector<1x32x32xbf16> to vector<32x32xbf16>
    %cst_32 = arith.constant dense<0.000000e+00> : vector<8x32xf32>
    %72 = tpu.matmul %69, %71, %cst_32 {dimension_numbers = #tpu.dot_dimension_numbers<[1], [0], [0], [1], [0, 0, 1, 1], [], []>} : vector<8x32xbf16>, vector<32x32xbf16>, vector<8x32xf32> -> vector<8x32xf32>
    %c0_33 = arith.constant 0 : index
    %c0_34 = arith.constant 0 : index
    %c0_35 = arith.constant 0 : index
    %73 = vector.load %arg9[%c0_33, %c0_34, %c0_35] : memref<1x1x32xf32, #tpu.memory_space<vmem>>, vector<1x1x32xf32>
    %74 = vector.shape_cast %73 : vector<1x1x32xf32> to vector<1x32xf32>
    %75 = vector.broadcast %74 : vector<1x32xf32> to vector<8x32xf32>
    %76 = arith.addf %72, %75 : vector<8x32xf32>
    %77 = arith.addf %76, %3 : vector<8x32xf32>
    %c0_36 = arith.constant 0 : index
    %c0_37 = arith.constant 0 : index
    %c0_38 = arith.constant 0 : index
    %78 = vector.load %arg10[%c0_36, %c0_37, %c0_38] : memref<1x1x32xf32, #tpu.memory_space<vmem>>, vector<1x1x32xf32>
    %79 = vector.shape_cast %78 : vector<1x1x32xf32> to vector<1x32xf32>
    %c0_39 = arith.constant 0 : index
    %c0_40 = arith.constant 0 : index
    %c0_41 = arith.constant 0 : index
    %80 = vector.load %arg11[%c0_39, %c0_40, %c0_41] : memref<1x1x32xf32, #tpu.memory_space<vmem>>, vector<1x1x32xf32>
    %81 = vector.shape_cast %80 : vector<1x1x32xf32> to vector<1x32xf32>
    %cst_42 = arith.constant dense<0.000000e+00> : vector<8xf32>
    %82 = vector.multi_reduction <add>, %77, %cst_42 [1] : vector<8x32xf32> to vector<8xf32>
    %83 = vector.shape_cast %82 : vector<8xf32> to vector<8x1xf32>
    %cst_43 = arith.constant 3.200000e+01 : f32
    %84 = vector.broadcast %cst_43 : f32 to vector<8x1xf32>
    %85 = arith.divf %83, %84 : vector<8x1xf32>
    %86 = vector.broadcast %85 : vector<8x1xf32> to vector<8x32xf32>
    %87 = arith.subf %77, %86 : vector<8x32xf32>
    %88 = arith.mulf %87, %87 : vector<8x32xf32>
    %cst_44 = arith.constant dense<0.000000e+00> : vector<8xf32>
    %89 = vector.multi_reduction <add>, %88, %cst_44 [1] : vector<8x32xf32> to vector<8xf32>
    %90 = vector.shape_cast %89 : vector<8xf32> to vector<8x1xf32>
    %cst_45 = arith.constant 3.200000e+01 : f32
    %91 = vector.broadcast %cst_45 : f32 to vector<8x1xf32>
    %92 = arith.divf %90, %91 : vector<8x1xf32>
    %93 = vector.broadcast %85 : vector<8x1xf32> to vector<8x32xf32>
    %94 = arith.subf %77, %93 : vector<8x32xf32>
    %cst_46 = arith.constant 9.99999974E-6 : f32
    %95 = vector.broadcast %cst_46 : f32 to vector<8x1xf32>
    %96 = arith.addf %92, %95 : vector<8x1xf32>
    %97 = math.rsqrt %96 : vector<8x1xf32>
    %98 = vector.broadcast %97 : vector<8x1xf32> to vector<8x32xf32>
    %99 = arith.mulf %94, %98 : vector<8x32xf32>
    %100 = vector.broadcast %79 : vector<1x32xf32> to vector<8x32xf32>
    %101 = arith.mulf %99, %100 : vector<8x32xf32>
    %102 = vector.broadcast %81 : vector<1x32xf32> to vector<8x32xf32>
    %103 = arith.addf %101, %102 : vector<8x32xf32>
    %104 = arith.truncf %103 : vector<8x32xf32> to vector<8x32xbf16>
    %c0_47 = arith.constant 0 : index
    %c0_48 = arith.constant 0 : index
    %c0_49 = arith.constant 0 : index
    %105 = vector.load %arg12[%c0_47, %c0_48, %c0_49] : memref<1x32x64xbf16, #tpu.memory_space<vmem>>, vector<1x32x64xbf16>
    %106 = vector.shape_cast %105 : vector<1x32x64xbf16> to vector<32x64xbf16>
    %cst_50 = arith.constant dense<0.000000e+00> : vector<8x64xf32>
    %107 = tpu.matmul %104, %106, %cst_50 {dimension_numbers = #tpu.dot_dimension_numbers<[1], [0], [0], [1], [0, 0, 1, 1], [], []>} : vector<8x32xbf16>, vector<32x64xbf16>, vector<8x64xf32> -> vector<8x64xf32>
    %c0_51 = arith.constant 0 : index
    %c0_52 = arith.constant 0 : index
    %c0_53 = arith.constant 0 : index
    %108 = vector.load %arg13[%c0_51, %c0_52, %c0_53] : memref<1x1x64xf32, #tpu.memory_space<vmem>>, vector<1x1x64xf32>
    %109 = vector.shape_cast %108 : vector<1x1x64xf32> to vector<1x64xf32>
    %110 = vector.broadcast %109 : vector<1x64xf32> to vector<8x64xf32>
    %111 = arith.addf %107, %110 : vector<8x64xf32>
    %112 = arith.mulf %111, %111 : vector<8x64xf32>
    %113 = arith.mulf %111, %112 : vector<8x64xf32>
    %cst_54 = arith.constant 4.471500e-02 : f32
    %114 = vector.broadcast %cst_54 : f32 to vector<8x64xf32>
    %115 = arith.mulf %114, %113 : vector<8x64xf32>
    %116 = arith.addf %111, %115 : vector<8x64xf32>
    %cst_55 = arith.constant 0.797884583 : f32
    %117 = vector.broadcast %cst_55 : f32 to vector<8x64xf32>
    %118 = arith.mulf %117, %116 : vector<8x64xf32>
    %119 = math.tanh %118 : vector<8x64xf32>
    %cst_56 = arith.constant 1.000000e+00 : f32
    %120 = vector.broadcast %cst_56 : f32 to vector<8x64xf32>
    %121 = arith.addf %120, %119 : vector<8x64xf32>
    %cst_57 = arith.constant 5.000000e-01 : f32
    %122 = vector.broadcast %cst_57 : f32 to vector<8x64xf32>
    %123 = arith.mulf %122, %121 : vector<8x64xf32>
    %124 = arith.mulf %111, %123 : vector<8x64xf32>
    %125 = arith.truncf %124 : vector<8x64xf32> to vector<8x64xbf16>
    %c0_58 = arith.constant 0 : index
    %c0_59 = arith.constant 0 : index
    %c0_60 = arith.constant 0 : index
    %126 = vector.load %arg14[%c0_58, %c0_59, %c0_60] : memref<1x64x32xbf16, #tpu.memory_space<vmem>>, vector<1x64x32xbf16>
    %127 = vector.shape_cast %126 : vector<1x64x32xbf16> to vector<64x32xbf16>
    %cst_61 = arith.constant dense<0.000000e+00> : vector<8x32xf32>
    %128 = tpu.matmul %125, %127, %cst_61 {dimension_numbers = #tpu.dot_dimension_numbers<[1], [0], [0], [1], [0, 0, 1, 1], [], []>} : vector<8x64xbf16>, vector<64x32xbf16>, vector<8x32xf32> -> vector<8x32xf32>
    %c0_62 = arith.constant 0 : index
    %c0_63 = arith.constant 0 : index
    %c0_64 = arith.constant 0 : index
    %129 = vector.load %arg15[%c0_62, %c0_63, %c0_64] : memref<1x1x32xf32, #tpu.memory_space<vmem>>, vector<1x1x32xf32>
    %130 = vector.shape_cast %129 : vector<1x1x32xf32> to vector<1x32xf32>
    %131 = vector.broadcast %130 : vector<1x32xf32> to vector<8x32xf32>
    %132 = arith.addf %128, %131 : vector<8x32xf32>
    %133 = arith.addf %132, %103 : vector<8x32xf32>
    %c0_65 = arith.constant 0 : index
    %c0_66 = arith.constant 0 : index
    %c0_67 = arith.constant 0 : index
    %134 = vector.load %arg16[%c0_65, %c0_66, %c0_67] : memref<1x1x32xf32, #tpu.memory_space<vmem>>, vector<1x1x32xf32>
    %135 = vector.shape_cast %134 : vector<1x1x32xf32> to vector<1x32xf32>
    %c0_68 = arith.constant 0 : index
    %c0_69 = arith.constant 0 : index
    %c0_70 = arith.constant 0 : index
    %136 = vector.load %arg17[%c0_68, %c0_69, %c0_70] : memref<1x1x32xf32, #tpu.memory_space<vmem>>, vector<1x1x32xf32>
    %137 = vector.shape_cast %136 : vector<1x1x32xf32> to vector<1x32xf32>
    %cst_71 = arith.constant dense<0.000000e+00> : vector<8xf32>
    %138 = vector.multi_reduction <add>, %133, %cst_71 [1] : vector<8x32xf32> to vector<8xf32>
    %139 = vector.shape_cast %138 : vector<8xf32> to vector<8x1xf32>
    %cst_72 = arith.constant 3.200000e+01 : f32
    %140 = vector.broadcast %cst_72 : f32 to vector<8x1xf32>
    %141 = arith.divf %139, %140 : vector<8x1xf32>
    %142 = vector.broadcast %141 : vector<8x1xf32> to vector<8x32xf32>
    %143 = arith.subf %133, %142 : vector<8x32xf32>
    %144 = arith.mulf %143, %143 : vector<8x32xf32>
    %cst_73 = arith.constant dense<0.000000e+00> : vector<8xf32>
    %145 = vector.multi_reduction <add>, %144, %cst_73 [1] : vector<8x32xf32> to vector<8xf32>
    %146 = vector.shape_cast %145 : vector<8xf32> to vector<8x1xf32>
    %cst_74 = arith.constant 3.200000e+01 : f32
    %147 = vector.broadcast %cst_74 : f32 to vector<8x1xf32>
    %148 = arith.divf %146, %147 : vector<8x1xf32>
    %149 = vector.broadcast %141 : vector<8x1xf32> to vector<8x32xf32>
    %150 = arith.subf %133, %149 : vector<8x32xf32>
    %cst_75 = arith.constant 9.99999974E-6 : f32
    %151 = vector.broadcast %cst_75 : f32 to vector<8x1xf32>
    %152 = arith.addf %148, %151 : vector<8x1xf32>
    %153 = math.rsqrt %152 : vector<8x1xf32>
    %154 = vector.broadcast %153 : vector<8x1xf32> to vector<8x32xf32>
    %155 = arith.mulf %150, %154 : vector<8x32xf32>
    %156 = vector.broadcast %135 : vector<1x32xf32> to vector<8x32xf32>
    %157 = arith.mulf %155, %156 : vector<8x32xf32>
    %158 = vector.broadcast %137 : vector<1x32xf32> to vector<8x32xf32>
    %159 = arith.addf %157, %158 : vector<8x32xf32>
    %c0_76 = arith.constant 0 : index
    %c0_77 = arith.constant 0 : index
    %160 = vector.load %arg22[%c0_76, %c0_77] : memref<8x32xf32, #tpu.memory_space<vmem>>, vector<8x32xf32>
    tpu.vector_store %arg22[%c0_76, %c0_77], %159 {strides = array<i32>} : memref<8x32xf32, #tpu.memory_space<vmem>>, vector<8x32xf32>,
    %c1_i32 = arith.constant 1 : i32
    %161 = arith.cmpi eq, %arg1, %c1_i32 : i32
    %162 = arith.extui %161 : i1 to i32
    %c0_i32_78 = arith.constant 0 : i32
    %163 = arith.cmpi ne, %162, %c0_i32_78 : i32
    scf.if %163 {
      %164 = vector.extract_strided_slice %159 {offsets = [0, 0], sizes = [1, 32], strides = [1, 1]} : vector<8x32xf32> to vector<1x32xf32>
      %c0_79 = arith.constant 0 : index
      %c0_80 = arith.constant 0 : index
      %165 = vector.load %arg18[%c0_79, %c0_80] : memref<1x32xf32, #tpu.memory_space<vmem>>, vector<1x32xf32>
      %c0_81 = arith.constant 0 : index
      %c0_82 = arith.constant 0 : index
      %166 = vector.load %arg19[%c0_81, %c0_82] : memref<1x32xf32, #tpu.memory_space<vmem>>, vector<1x32xf32>
      %cst_83 = arith.constant dense<0.000000e+00> : vector<1xf32>
      %167 = vector.multi_reduction <add>, %164, %cst_83 [1] : vector<1x32xf32> to vector<1xf32>
      %168 = vector.shape_cast %167 : vector<1xf32> to vector<1x1xf32>
      %cst_84 = arith.constant 3.200000e+01 : f32
      %169 = vector.broadcast %cst_84 : f32 to vector<1x1xf32>
      %170 = arith.divf %168, %169 : vector<1x1xf32>
      %171 = vector.broadcast %170 : vector<1x1xf32> to vector<1x32xf32>
      %172 = arith.subf %164, %171 : vector<1x32xf32>
      %173 = arith.mulf %172, %172 : vector<1x32xf32>
      %cst_85 = arith.constant dense<0.000000e+00> : vector<1xf32>
      %174 = vector.multi_reduction <add>, %173, %cst_85 [1] : vector<1x32xf32> to vector<1xf32>
      %175 = vector.shape_cast %174 : vector<1xf32> to vector<1x1xf32>
      %cst_86 = arith.constant 3.200000e+01 : f32
      %176 = vector.broadcast %cst_86 : f32 to vector<1x1xf32>
      %177 = arith.divf %175, %176 : vector<1x1xf32>
      %178 = vector.broadcast %170 : vector<1x1xf32> to vector<1x32xf32>
      %179 = arith.subf %164, %178 : vector<1x32xf32>
      %cst_87 = arith.constant 9.99999974E-6 : f32
      %180 = vector.broadcast %cst_87 : f32 to vector<1x1xf32>
      %181 = arith.addf %177, %180 : vector<1x1xf32>
      %182 = math.rsqrt %181 : vector<1x1xf32>
      %183 = vector.broadcast %182 : vector<1x1xf32> to vector<1x32xf32>
      %184 = arith.mulf %179, %183 : vector<1x32xf32>
      %185 = arith.mulf %184, %165 : vector<1x32xf32>
      %186 = arith.addf %185, %166 : vector<1x32xf32>
      %187 = arith.truncf %186 : vector<1x32xf32> to vector<1x32xbf16>
      %c0_88 = arith.constant 0 : index
      %c0_89 = arith.constant 0 : index
      %188 = vector.load %arg20[%c0_88, %c0_89] : memref<32x32xbf16, #tpu.memory_space<vmem>>, vector<32x32xbf16>
      %cst_90 = arith.constant dense<0.000000e+00> : vector<1x32xf32>
      %189 = tpu.matmul %187, %188, %cst_90 {dimension_numbers = #tpu.dot_dimension_numbers<[1], [0], [0], [1], [0, 0, 1, 1], [], []>} : vector<1x32xbf16>, vector<32x32xbf16>, vector<1x32xf32> -> vector<1x32xf32>
      %190 = tpu.concatenate %186, %189 in 1 : vector<1x32xf32>, vector<1x32xf32> -> vector<1x64xf32>
      %c0_91 = arith.constant 0 : index
      %c0_92 = arith.constant 0 : index
      %c0_93 = arith.constant 0 : index
      %191 = vector.load %arg21[%c0_91, %c0_92, %c0_93] : memref<1x1x64xf32, #tpu.memory_space<vmem>>, vector<1x1x64xf32>
      %192 = vector.shape_cast %191 : vector<1x1x64xf32> to vector<1x64xf32>
      %193 = vector.shape_cast %190 : vector<1x64xf32> to vector<1x1x64xf32>
      tpu.vector_store %arg21[%c0_91, %c0_92, %c0_93], %193 {strides = array<i32>} : memref<1x1x64xf32, #tpu.memory_space<vmem>>, vector<1x1x64xf32>,
    } else {
    }
    return
  }
  func.func @transform_0(%arg0: i32, %arg1: i32) -> (i32, i32, i32) {
    %c0_i32 = arith.constant 0 : i32
    %c0_i32_0 = arith.constant 0 : i32
    %c0_i32_1 = arith.constant 0 : i32
    return %arg0, %c0_i32, %c0_i32_0 : i32, i32, i32
  }
  func.func @transform_1(%arg0: i32, %arg1: i32) -> (i32, i32, i32) {
    %c0_i32 = arith.constant 0 : i32
    %c0_i32_0 = arith.constant 0 : i32
    %c0_i32_1 = arith.constant 0 : i32
    return %arg0, %c0_i32, %c0_i32_0 : i32, i32, i32
  }
  func.func @transform_2(%arg0: i32, %arg1: i32) -> (i32, i32) {
    %c0_i32 = arith.constant 0 : i32
    %c0_i32_0 = arith.constant 0 : i32
    %c0_i32_1 = arith.constant 0 : i32
    return %c0_i32, %c0_i32_0 : i32, i32
  }
  func.func @transform_3(%arg0: i32, %arg1: i32) -> (i32, i32) {
    %c0_i32 = arith.constant 0 : i32
    %c0_i32_0 = arith.constant 0 : i32
    %c0_i32_1 = arith.constant 0 : i32
    return %c0_i32, %c0_i32_0 : i32, i32
  }
  func.func @transform_4(%arg0: i32, %arg1: i32) -> (i32, i32, i32) {
    %c0_i32 = arith.constant 0 : i32
    %c0_i32_0 = arith.constant 0 : i32
    %c0_i32_1 = arith.constant 0 : i32
    return %arg1, %c0_i32, %c0_i32_0 : i32, i32, i32
  }
  func.func @transform_5(%arg0: i32, %arg1: i32) -> (i32, i32, i32) {
    %c0_i32 = arith.constant 0 : i32
    %c0_i32_0 = arith.constant 0 : i32
    %c0_i32_1 = arith.constant 0 : i32
    return %arg1, %c0_i32, %c0_i32_0 : i32, i32, i32
  }
  func.func @transform_6(%arg0: i32, %arg1: i32) -> (i32, i32, i32) {
    %c0_i32 = arith.constant 0 : i32
    %c0_i32_0 = arith.constant 0 : i32
    %c0_i32_1 = arith.constant 0 : i32
    return %arg1, %c0_i32, %c0_i32_0 : i32, i32, i32
  }
  func.func @transform_7(%arg0: i32, %arg1: i32) -> (i32, i32, i32) {
    %c0_i32 = arith.constant 0 : i32
    %c0_i32_0 = arith.constant 0 : i32
    %c0_i32_1 = arith.constant 0 : i32
    return %arg1, %c0_i32, %c0_i32_0 : i32, i32, i32
  }
  func.func @transform_8(%arg0: i32, %arg1: i32) -> (i32, i32, i32) {
    %c0_i32 = arith.constant 0 : i32
    %c0_i32_0 = arith.constant 0 : i32
    %c0_i32_1 = arith.constant 0 : i32
    return %arg1, %c0_i32, %c0_i32_0 : i32, i32, i32
  }
  func.func @transform_9(%arg0: i32, %arg1: i32) -> (i32, i32, i32) {
    %c0_i32 = arith.constant 0 : i32
    %c0_i32_0 = arith.constant 0 : i32
    %c0_i32_1 = arith.constant 0 : i32
    return %arg1, %c0_i32, %c0_i32_0 : i32, i32, i32
  }
  func.func @transform_10(%arg0: i32, %arg1: i32) -> (i32, i32, i32) {
    %c0_i32 = arith.constant 0 : i32
    %c0_i32_0 = arith.constant 0 : i32
    %c0_i32_1 = arith.constant 0 : i32
    return %arg1, %c0_i32, %c0_i32_0 : i32, i32, i32
  }
  func.func @transform_11(%arg0: i32, %arg1: i32) -> (i32, i32, i32) {
    %c0_i32 = arith.constant 0 : i32
    %c0_i32_0 = arith.constant 0 : i32
    %c0_i32_1 = arith.constant 0 : i32
    return %arg1, %c0_i32, %c0_i32_0 : i32, i32, i32
  }
  func.func @transform_12(%arg0: i32, %arg1: i32) -> (i32, i32, i32) {
    %c0_i32 = arith.constant 0 : i32
    %c0_i32_0 = arith.constant 0 : i32
    %c0_i32_1 = arith.constant 0 : i32
    return %arg1, %c0_i32, %c0_i32_0 : i32, i32, i32
  }
  func.func @transform_13(%arg0: i32, %arg1: i32) -> (i32, i32, i32) {
    %c0_i32 = arith.constant 0 : i32
    %c0_i32_0 = arith.constant 0 : i32
    %c0_i32_1 = arith.constant 0 : i32
    return %arg1, %c0_i32, %c0_i32_0 : i32, i32, i32
  }
  func.func @transform_14(%arg0: i32, %arg1: i32) -> (i32, i32, i32) {
    %c0_i32 = arith.constant 0 : i32
    %c0_i32_0 = arith.constant 0 : i32
    %c0_i32_1 = arith.constant 0 : i32
    return %arg1, %c0_i32, %c0_i32_0 : i32, i32, i32
  }
  func.func @transform_15(%arg0: i32, %arg1: i32) -> (i32, i32, i32) {
    %c0_i32 = arith.constant 0 : i32
    %c0_i32_0 = arith.constant 0 : i32
    %c0_i32_1 = arith.constant 0 : i32
    return %arg1, %c0_i32, %c0_i32_0 : i32, i32, i32
  }
  func.func @transform_16(%arg0: i32, %arg1: i32) -> (i32, i32) {
    %c0_i32 = arith.constant 0 : i32
    %c0_i32_0 = arith.constant 0 : i32
    %c0_i32_1 = arith.constant 0 : i32
    return %c0_i32, %c0_i32_0 : i32, i32
  }
  func.func @transform_17(%arg0: i32, %arg1: i32) -> (i32, i32) {
    %c0_i32 = arith.constant 0 : i32
    %c0_i32_0 = arith.constant 0 : i32
    %c0_i32_1 = arith.constant 0 : i32
    return %c0_i32, %c0_i32_0 : i32, i32
  }
  func.func @transform_18(%arg0: i32, %arg1: i32) -> (i32, i32) {
    %c0_i32 = arith.constant 0 : i32
    %c0_i32_0 = arith.constant 0 : i32
    %c0_i32_1 = arith.constant 0 : i32
    return %c0_i32, %c0_i32_0 : i32, i32
  }
  func.func @transform_19(%arg0: i32, %arg1: i32) -> (i32, i32, i32) {
    %c0_i32 = arith.constant 0 : i32
    %c0_i32_0 = arith.constant 0 : i32
    %c0_i32_1 = arith.constant 0 : i32
    return %arg0, %c0_i32, %c0_i32_0 : i32, i32, i32
  }
}

</mosaic_0001>

<llo_original>
// kernel: roberta_for_latent_forward.1
$region0: #{roberta_for_latent_forward.1}
  #allocation0 [shape = 'u32[]', space=smem, size = 0x4, offset = 0x4, fixed_abs, tag = 'smem constant byte address 0x4 - core index']
  #allocation1 [shape = 'u32[72,128]{1,0:T(1,128)}', space=vmem, size = 0x9000, scoped, tag = 'internal scratch']
  #allocation2 [shape = 'f32[8,32]{1,0:T(8,128)}', space=vmem, size = 0x1000, scoped, tag = 'scratch operand']
  #allocation3 [shape = 'bf16[8,32]{1,0:T(8,128)(2,1)}', space=vmem, size = 0x800, scoped, tag = 'scratch operand']
  %s0 = inlined_call_operand.vmem [shape: f32[2,8,32], index: 0, kind: input, shape index: {}]
  %s1 = inlined_call_operand.vmem [shape: f32[2,1,8], index: 1, kind: input, shape index: {}]
  %s2 = inlined_call_operand.vmem [shape: f32[1,32], index: 2, kind: input, shape index: {}]
  %s3 = inlined_call_operand.vmem [shape: f32[1,32], index: 3, kind: input, shape index: {}]
  %s4 = inlined_call_operand.vmem [shape: bf16[2,32,96], index: 4, kind: input, shape index: {}]
  %s5 = inlined_call_operand.vmem [shape: f32[2,1,96], index: 5, kind: input, shape index: {}]
  %s6 = inlined_call_operand.vmem [shape: bf16[2,32,32], index: 6, kind: input, shape index: {}]
  %s7 = inlined_call_operand.vmem [shape: f32[2,1,32], index: 7, kind: input, shape index: {}]
  %s8 = inlined_call_operand.vmem [shape: f32[2,1,32], index: 8, kind: input, shape index: {}]
  %s9 = inlined_call_operand.vmem [shape: f32[2,1,32], index: 9, kind: input, shape index: {}]
  %s10 = inlined_call_operand.vmem [shape: bf16[2,32,64], index: 10, kind: input, shape index: {}]
  %s11 = inlined_call_operand.vmem [shape: f32[2,1,64], index: 11, kind: input, shape index: {}]
  %s12 = inlined_call_operand.vmem [shape: bf16[2,64,32], index: 12, kind: input, shape index: {}]
  %s13 = inlined_call_operand.vmem [shape: f32[2,1,32], index: 13, kind: input, shape index: {}]
  %s14 = inlined_call_operand.vmem [shape: f32[2,1,32], index: 14, kind: input, shape index: {}]
  %s15 = inlined_call_operand.vmem [shape: f32[2,1,32], index: 15, kind: input, shape index: {}]
  %s16 = inlined_call_operand.vmem [shape: f32[1,32], index: 16, kind: input, shape index: {}]
  %s17 = inlined_call_operand.vmem [shape: f32[1,32], index: 17, kind: input, shape index: {}]
  %s18 = inlined_call_operand.vmem [shape: bf16[32,32], index: 18, kind: input, shape index: {}]
  %s19 = inlined_call_operand.vmem [shape: f32[2,1,64], index: 19, kind: output, shape index: {}]
  %s20 = sld [smem:[#allocation0]]
  $region117: #{roberta_for_latent_forward.1} parent=0
    _
  %s22 = ssub.s32 1, %s20
  %s23 = scalar_select 0, %s22, %s20
  loop: start=0, step=1, limit=6
  $region2: #{roberta_for_latent_forward.1} parent=0 // loop_pre_header
    _
  $region3: #{roberta_for_latent_forward.1} parent=0 // loop_header
    %s25 = sphi 0, %s29
    %p26 = scmp.ge.s32.totalorder %s25, 6
    %s32 = sphi 0, %s44
    %s33 = sphi 0, %s40
    %s34 = sphi 0, %s32
    %s35 = sphi 0, %s33
    %s36 = sphi 0, %s34
    %s37 = sphi 0, %s35
    %s47 = sphi 0, %s49
    %s50 = sphi 0, %s47
    %s51 = sphi 0, %s50
    %s67 = sphi 0, %s51
    %s73 = sphi 0, %s75
    %s76 = sphi 0, %s73
    %s77 = sphi 0, %s76
    %s93 = sphi 0, %s77
    %s97 = sphi 0, %s97
    %s99 = sphi 0, %s97
    %s100 = sphi 0, %s99
    %s114 = sphi 0, %s100
    %s118 = sphi 0, %s118
    %s120 = sphi 0, %s118
    %s121 = sphi 0, %s120
    %s135 = sphi 0, %s121
    %s141 = sphi 0, %s143
    %s144 = sphi 0, %s141
    %s145 = sphi 0, %s144
    %s161 = sphi 0, %s145
    %s167 = sphi 0, %s169
    %s170 = sphi 0, %s167
    %s171 = sphi 0, %s170
    %s187 = sphi 0, %s171
    %s193 = sphi 0, %s195
    %s196 = sphi 0, %s193
    %s197 = sphi 0, %s196
    %s213 = sphi 0, %s197
    %s219 = sphi 0, %s221
    %s222 = sphi 0, %s219
    %s223 = sphi 0, %s222
    %s239 = sphi 0, %s223
    %s245 = sphi 0, %s247
    %s248 = sphi 0, %s245
    %s249 = sphi 0, %s248
    %s265 = sphi 0, %s249
    %s271 = sphi 0, %s273
    %s274 = sphi 0, %s271
    %s275 = sphi 0, %s274
    %s291 = sphi 0, %s275
    %s297 = sphi 0, %s299
    %s300 = sphi 0, %s297
    %s301 = sphi 0, %s300
    %s317 = sphi 0, %s301
    %s323 = sphi 0, %s325
    %s326 = sphi 0, %s323
    %s327 = sphi 0, %s326
    %s343 = sphi 0, %s327
    %s349 = sphi 0, %s351
    %s352 = sphi 0, %s349
    %s353 = sphi 0, %s352
    %s369 = sphi 0, %s353
    %s375 = sphi 0, %s377
    %s378 = sphi 0, %s375
    %s379 = sphi 0, %s378
    %s395 = sphi 0, %s379
    %s401 = sphi 0, %s403
    %s404 = sphi 0, %s401
    %s405 = sphi 0, %s404
    %s421 = sphi 0, %s405
    %s427 = sphi 0, %s429
    %s430 = sphi 0, %s427
    %s431 = sphi 0, %s430
    %s447 = sphi 0, %s431
    %s451 = sphi 0, %s451
    %s453 = sphi 0, %s451
    %s454 = sphi 0, %s453
    %s468 = sphi 0, %s454
    %s472 = sphi 0, %s472
    %s474 = sphi 0, %s472
    %s475 = sphi 0, %s474
    %s489 = sphi 0, %s475
    %s493 = sphi 0, %s493
    %s495 = sphi 0, %s493
    %s496 = sphi 0, %s495
    %s510 = sphi 0, %s496
    %s516 = sphi 0, %s518
    %s519 = sphi 0, %s516
    %s520 = sphi 0, %s519
    %s536 = sphi 0, %s520
  $region4: #{roberta_for_latent_forward.1} parent=0 // loop_header_branch
    %28 = sbr.rel (%p26) target = $region8
  $region5: #{roberta_for_latent_forward.1} parent=0 // loop_body
    %s30 = ssub.s32 %s25, 1
    %s31 = ssub.s32 %s25, 2
    %s38 = sadd.s32 1, %s33
    %p39 = scmp.ge.s32.totalorder %s38, 2
    %s40 = scalar_select %p39, 0, %s38
    %s41 = sadd.s32 1, %s32
    %s42 = scalar_select %p39, %s41, %s32
    %p43 = scmp.ge.s32.totalorder %s42, 2
    %s44 = scalar_select %p43, 0, %s42
    %s45 = ssub.s32 %s32, %s44
    %p46 = scmp.eq.s32.totalorder %s45, 0
    %s48 = sadd.s32 %s47, 1
    %s49 = scalar_select %p46, %s47, %s48
    %p52 = pneg %p46
    %p53 = scmp.eq.s32.totalorder %s25, 3
    %p54 = por %p52, %p53
    %p55 = scmp.ne.s32.totalorder %s47, %s50
    %p56 = scmp.eq.s32.totalorder %s25, 0
    %p57 = por %p55, %p56
    %p58 = scmp.ne.s32.totalorder %s47, %s50
    %p59 = scmp.eq.s32.totalorder %s30, 3
    %p60 = por %p58, %p59
    %p61 = scmp.ne.s32.totalorder %s50, %s51
    %p62 = scmp.eq.s32.totalorder %s30, 0
    %p63 = por %p61, %p62
    %p64 = scmp.ne.s32.totalorder %s50, %s51
    %p65 = scmp.eq.s32.totalorder %s31, 3
    %p66 = por %p64, %p65
    %p68 = scmp.ne.s32.totalorder %s51, %s67
    %p69 = scmp.eq.s32.totalorder %s31, 0
    %p70 = por %p68, %p69
    %s71 = ssub.s32 %s32, %s44
    %p72 = scmp.eq.s32.totalorder %s71, 0
    %s74 = sadd.s32 %s73, 1
    %s75 = scalar_select %p72, %s73, %s74
    %p78 = pneg %p72
    %p79 = scmp.eq.s32.totalorder %s25, 3
    %p80 = por %p78, %p79
    %p81 = scmp.ne.s32.totalorder %s73, %s76
    %p82 = scmp.eq.s32.totalorder %s25, 0
    %p83 = por %p81, %p82
    %p84 = scmp.ne.s32.totalorder %s73, %s76
    %p85 = scmp.eq.s32.totalorder %s30, 3
    %p86 = por %p84, %p85
    %p87 = scmp.ne.s32.totalorder %s76, %s77
    %p88 = scmp.eq.s32.totalorder %s30, 0
    %p89 = por %p87, %p88
    %p90 = scmp.ne.s32.totalorder %s76, %s77
    %p91 = scmp.eq.s32.totalorder %s31, 3
    %p92 = por %p90, %p91
    %p94 = scmp.ne.s32.totalorder %s77, %s93
    %p95 = scmp.eq.s32.totalorder %s31, 0
    %p96 = por %p94, %p95
    %s98 = sadd.s32 %s97, 1
    %p101 = scmp.eq.s32.totalorder %s25, 3
    %p102 = scmp.ne.s32.totalorder %s97, %s99
    %p103 = scmp.eq.s32.totalorder %s25, 0
    %p104 = por %p102, %p103
    %p105 = scmp.ne.s32.totalorder %s97, %s99
    %p106 = scmp.eq.s32.totalorder %s30, 3
    %p107 = por %p105, %p106
    %p108 = scmp.ne.s32.totalorder %s99, %s100
    %p109 = scmp.eq.s32.totalorder %s30, 0
    %p110 = por %p108, %p109
    %p111 = scmp.ne.s32.totalorder %s99, %s100
    %p112 = scmp.eq.s32.totalorder %s31, 3
    %p113 = por %p111, %p112
    %p115 = scmp.ne.s32.totalorder %s100, %s114
    %p116 = scmp.eq.s32.totalorder %s31, 0
    %p117 = por %p115, %p116
    %s119 = sadd.s32 %s118, 1
    %p122 = scmp.eq.s32.totalorder %s25, 3
    %p123 = scmp.ne.s32.totalorder %s118, %s120
    %p124 = scmp.eq.s32.totalorder %s25, 0
    %p125 = por %p123, %p124
    %p126 = scmp.ne.s32.totalorder %s118, %s120
    %p127 = scmp.eq.s32.totalorder %s30, 3
    %p128 = por %p126, %p127
    %p129 = scmp.ne.s32.totalorder %s120, %s121
    %p130 = scmp.eq.s32.totalorder %s30, 0
    %p131 = por %p129, %p130
    %p132 = scmp.ne.s32.totalorder %s120, %s121
    %p133 = scmp.eq.s32.totalorder %s31, 3
    %p134 = por %p132, %p133
    %p136 = scmp.ne.s32.totalorder %s121, %s135
    %p137 = scmp.eq.s32.totalorder %s31, 0
    %p138 = por %p136, %p137
    %s139 = ssub.s32 %s33, %s40
    %p140 = scmp.eq.s32.totalorder %s139, 0
    %s142 = sadd.s32 %s141, 1
    %s143 = scalar_select %p140, %s141, %s142
    %p146 = pneg %p140
    %p147 = scmp.eq.s32.totalorder %s25, 3
    %p148 = por %p146, %p147
    %p149 = scmp.ne.s32.totalorder %s141, %s144
    %p150 = scmp.eq.s32.totalorder %s25, 0
    %p151 = por %p149, %p150
    %p152 = scmp.ne.s32.totalorder %s141, %s144
    %p153 = scmp.eq.s32.totalorder %s30, 3
    %p154 = por %p152, %p153
    %p155 = scmp.ne.s32.totalorder %s144, %s145
    %p156 = scmp.eq.s32.totalorder %s30, 0
    %p157 = por %p155, %p156
    %p158 = scmp.ne.s32.totalorder %s144, %s145
    %p159 = scmp.eq.s32.totalorder %s31, 3
    %p160 = por %p158, %p159
    %p162 = scmp.ne.s32.totalorder %s145, %s161
    %p163 = scmp.eq.s32.totalorder %s31, 0
    %p164 = por %p162, %p163
    %s165 = ssub.s32 %s33, %s40
    %p166 = scmp.eq.s32.totalorder %s165, 0
    %s168 = sadd.s32 %s167, 1
    %s169 = scalar_select %p166, %s167, %s168
    %p172 = pneg %p166
    %p173 = scmp.eq.s32.totalorder %s25, 3
    %p174 = por %p172, %p173
    %p175 = scmp.ne.s32.totalorder %s167, %s170
    %p176 = scmp.eq.s32.totalorder %s25, 0
    %p177 = por %p175, %p176
    %p178 = scmp.ne.s32.totalorder %s167, %s170
    %p179 = scmp.eq.s32.totalorder %s30, 3
    %p180 = por %p178, %p179
    %p181 = scmp.ne.s32.totalorder %s170, %s171
    %p182 = scmp.eq.s32.totalorder %s30, 0
    %p183 = por %p181, %p182
    %p184 = scmp.ne.s32.totalorder %s170, %s171
    %p185 = scmp.eq.s32.totalorder %s31, 3
    %p186 = por %p184, %p185
    %p188 = scmp.ne.s32.totalorder %s171, %s187
    %p189 = scmp.eq.s32.totalorder %s31, 0
    %p190 = por %p188, %p189
    %s191 = ssub.s32 %s33, %s40
    %p192 = scmp.eq.s32.totalorder %s191, 0
    %s194 = sadd.s32 %s193, 1
    %s195 = scalar_select %p192, %s193, %s194
    %p198 = pneg %p192
    %p199 = scmp.eq.s32.totalorder %s25, 3
    %p200 = por %p198, %p199
    %p201 = scmp.ne.s32.totalorder %s193, %s196
    %p202 = scmp.eq.s32.totalorder %s25, 0
    %p203 = por %p201, %p202
    %p204 = scmp.ne.s32.totalorder %s193, %s196
    %p205 = scmp.eq.s32.totalorder %s30, 3
    %p206 = por %p204, %p205
    %p207 = scmp.ne.s32.totalorder %s196, %s197
    %p208 = scmp.eq.s32.totalorder %s30, 0
    %p209 = por %p207, %p208
    %p210 = scmp.ne.s32.totalorder %s196, %s197
    %p211 = scmp.eq.s32.totalorder %s31, 3
    %p212 = por %p210, %p211
    %p214 = scmp.ne.s32.totalorder %s197, %s213
    %p215 = scmp.eq.s32.totalorder %s31, 0
    %p216 = por %p214, %p215
    %s217 = ssub.s32 %s33, %s40
    %p218 = scmp.eq.s32.totalorder %s217, 0
    %s220 = sadd.s32 %s219, 1
    %s221 = scalar_select %p218, %s219, %s220
    %p224 = pneg %p218
    %p225 = scmp.eq.s32.totalorder %s25, 3
    %p226 = por %p224, %p225
    %p227 = scmp.ne.s32.totalorder %s219, %s222
    %p228 = scmp.eq.s32.totalorder %s25, 0
    %p229 = por %p227, %p228
    %p230 = scmp.ne.s32.totalorder %s219, %s222
    %p231 = scmp.eq.s32.totalorder %s30, 3
    %p232 = por %p230, %p231
    %p233 = scmp.ne.s32.totalorder %s222, %s223
    %p234 = scmp.eq.s32.totalorder %s30, 0
    %p235 = por %p233, %p234
    %p236 = scmp.ne.s32.totalorder %s222, %s223
    %p237 = scmp.eq.s32.totalorder %s31, 3
    %p238 = por %p236, %p237
    %p240 = scmp.ne.s32.totalorder %s223, %s239
    %p241 = scmp.eq.s32.totalorder %s31, 0
    %p242 = por %p240, %p241
    %s243 = ssub.s32 %s33, %s40
    %p244 = scmp.eq.s32.totalorder %s243, 0
    %s246 = sadd.s32 %s245, 1
    %s247 = scalar_select %p244, %s245, %s246
    %p250 = pneg %p244
    %p251 = scmp.eq.s32.totalorder %s25, 3
    %p252 = por %p250, %p251
    %p253 = scmp.ne.s32.totalorder %s245, %s248
    %p254 = scmp.eq.s32.totalorder %s25, 0
    %p255 = por %p253, %p254
    %p256 = scmp.ne.s32.totalorder %s245, %s248
    %p257 = scmp.eq.s32.totalorder %s30, 3
    %p258 = por %p256, %p257
    %p259 = scmp.ne.s32.totalorder %s248, %s249
    %p260 = scmp.eq.s32.totalorder %s30, 0
    %p261 = por %p259, %p260
    %p262 = scmp.ne.s32.totalorder %s248, %s249
    %p263 = scmp.eq.s32.totalorder %s31, 3
    %p264 = por %p262, %p263
    %p266 = scmp.ne.s32.totalorder %s249, %s265
    %p267 = scmp.eq.s32.totalorder %s31, 0
    %p268 = por %p266, %p267
    %s269 = ssub.s32 %s33, %s40
    %p270 = scmp.eq.s32.totalorder %s269, 0
    %s272 = sadd.s32 %s271, 1
    %s273 = scalar_select %p270, %s271, %s272
    %p276 = pneg %p270
    %p277 = scmp.eq.s32.totalorder %s25, 3
    %p278 = por %p276, %p277
    %p279 = scmp.ne.s32.totalorder %s271, %s274
    %p280 = scmp.eq.s32.totalorder %s25, 0
    %p281 = por %p279, %p280
    %p282 = scmp.ne.s32.totalorder %s271, %s274
    %p283 = scmp.eq.s32.totalorder %s30, 3
    %p284 = por %p282, %p283
    %p285 = scmp.ne.s32.totalorder %s274, %s275
    %p286 = scmp.eq.s32.totalorder %s30, 0
    %p287 = por %p285, %p286
    %p288 = scmp.ne.s32.totalorder %s274, %s275
    %p289 = scmp.eq.s32.totalorder %s31, 3
    %p290 = por %p288, %p289
    %p292 = scmp.ne.s32.totalorder %s275, %s291
    %p293 = scmp.eq.s32.totalorder %s31, 0
    %p294 = por %p292, %p293
    %s295 = ssub.s32 %s33, %s40
    %p296 = scmp.eq.s32.totalorder %s295, 0
    %s298 = sadd.s32 %s297, 1
    %s299 = scalar_select %p296, %s297, %s298
    %p302 = pneg %p296
    %p303 = scmp.eq.s32.totalorder %s25, 3
    %p304 = por %p302, %p303
    %p305 = scmp.ne.s32.totalorder %s297, %s300
    %p306 = scmp.eq.s32.totalorder %s25, 0
    %p307 = por %p305, %p306
    %p308 = scmp.ne.s32.totalorder %s297, %s300
    %p309 = scmp.eq.s32.totalorder %s30, 3
    %p310 = por %p308, %p309
    %p311 = scmp.ne.s32.totalorder %s300, %s301
    %p312 = scmp.eq.s32.totalorder %s30, 0
    %p313 = por %p311, %p312
    %p314 = scmp.ne.s32.totalorder %s300, %s301
    %p315 = scmp.eq.s32.totalorder %s31, 3
    %p316 = por %p314, %p315
    %p318 = scmp.ne.s32.totalorder %s301, %s317
    %p319 = scmp.eq.s32.totalorder %s31, 0
    %p320 = por %p318, %p319
    %s321 = ssub.s32 %s33, %s40
    %p322 = scmp.eq.s32.totalorder %s321, 0
    %s324 = sadd.s32 %s323, 1
    %s325 = scalar_select %p322, %s323, %s324
    %p328 = pneg %p322
    %p329 = scmp.eq.s32.totalorder %s25, 3
    %p330 = por %p328, %p329
    %p331 = scmp.ne.s32.totalorder %s323, %s326
    %p332 = scmp.eq.s32.totalorder %s25, 0
    %p333 = por %p331, %p332
    %p334 = scmp.ne.s32.totalorder %s323, %s326
    %p335 = scmp.eq.s32.totalorder %s30, 3
    %p336 = por %p334, %p335
    %p337 = scmp.ne.s32.totalorder %s326, %s327
    %p338 = scmp.eq.s32.totalorder %s30, 0
    %p339 = por %p337, %p338
    %p340 = scmp.ne.s32.totalorder %s326, %s327
    %p341 = scmp.eq.s32.totalorder %s31, 3
    %p342 = por %p340, %p341
    %p344 = scmp.ne.s32.totalorder %s327, %s343
    %p345 = scmp.eq.s32.totalorder %s31, 0
    %p346 = por %p344, %p345
    %s347 = ssub.s32 %s33, %s40
    %p348 = scmp.eq.s32.totalorder %s347, 0
    %s350 = sadd.s32 %s349, 1
    %s351 = scalar_select %p348, %s349, %s350
    %p354 = pneg %p348
    %p355 = scmp.eq.s32.totalorder %s25, 3
    %p356 = por %p354, %p355
    %p357 = scmp.ne.s32.totalorder %s349, %s352
    %p358 = scmp.eq.s32.totalorder %s25, 0
    %p359 = por %p357, %p358
    %p360 = scmp.ne.s32.totalorder %s349, %s352
    %p361 = scmp.eq.s32.totalorder %s30, 3
    %p362 = por %p360, %p361
    %p363 = scmp.ne.s32.totalorder %s352, %s353
    %p364 = scmp.eq.s32.totalorder %s30, 0
    %p365 = por %p363, %p364
    %p366 = scmp.ne.s32.totalorder %s352, %s353
    %p367 = scmp.eq.s32.totalorder %s31, 3
    %p368 = por %p366, %p367
    %p370 = scmp.ne.s32.totalorder %s353, %s369
    %p371 = scmp.eq.s32.totalorder %s31, 0
    %p372 = por %p370, %p371
    %s373 = ssub.s32 %s33, %s40
    %p374 = scmp.eq.s32.totalorder %s373, 0
    %s376 = sadd.s32 %s375, 1
    %s377 = scalar_select %p374, %s375, %s376
    %p380 = pneg %p374
    %p381 = scmp.eq.s32.totalorder %s25, 3
    %p382 = por %p380, %p381
    %p383 = scmp.ne.s32.totalorder %s375, %s378
    %p384 = scmp.eq.s32.totalorder %s25, 0
    %p385 = por %p383, %p384
    %p386 = scmp.ne.s32.totalorder %s375, %s378
    %p387 = scmp.eq.s32.totalorder %s30, 3
    %p388 = por %p386, %p387
    %p389 = scmp.ne.s32.totalorder %s378, %s379
    %p390 = scmp.eq.s32.totalorder %s30, 0
    %p391 = por %p389, %p390
    %p392 = scmp.ne.s32.totalorder %s378, %s379
    %p393 = scmp.eq.s32.totalorder %s31, 3
    %p394 = por %p392, %p393
    %p396 = scmp.ne.s32.totalorder %s379, %s395
    %p397 = scmp.eq.s32.totalorder %s31, 0
    %p398 = por %p396, %p397
    %s399 = ssub.s32 %s33, %s40
    %p400 = scmp.eq.s32.totalorder %s399, 0
    %s402 = sadd.s32 %s401, 1
    %s403 = scalar_select %p400, %s401, %s402
    %p406 = pneg %p400
    %p407 = scmp.eq.s32.totalorder %s25, 3
    %p408 = por %p406, %p407
    %p409 = scmp.ne.s32.totalorder %s401, %s404
    %p410 = scmp.eq.s32.totalorder %s25, 0
    %p411 = por %p409, %p410
    %p412 = scmp.ne.s32.totalorder %s401, %s404
    %p413 = scmp.eq.s32.totalorder %s30, 3
    %p414 = por %p412, %p413
    %p415 = scmp.ne.s32.totalorder %s404, %s405
    %p416 = scmp.eq.s32.totalorder %s30, 0
    %p417 = por %p415, %p416
    %p418 = scmp.ne.s32.totalorder %s404, %s405
    %p419 = scmp.eq.s32.totalorder %s31, 3
    %p420 = por %p418, %p419
    %p422 = scmp.ne.s32.totalorder %s405, %s421
    %p423 = scmp.eq.s32.totalorder %s31, 0
    %p424 = por %p422, %p423
    %s425 = ssub.s32 %s33, %s40
    %p426 = scmp.eq.s32.totalorder %s425, 0
    %s428 = sadd.s32 %s427, 1
    %s429 = scalar_select %p426, %s427, %s428
    %p432 = pneg %p426
    %p433 = scmp.eq.s32.totalorder %s25, 3
    %p434 = por %p432, %p433
    %p435 = scmp.ne.s32.totalorder %s427, %s430
    %p436 = scmp.eq.s32.totalorder %s25, 0
    %p437 = por %p435, %p436
    %p438 = scmp.ne.s32.totalorder %s427, %s430
    %p439 = scmp.eq.s32.totalorder %s30, 3
    %p440 = por %p438, %p439
    %p441 = scmp.ne.s32.totalorder %s430, %s431
    %p442 = scmp.eq.s32.totalorder %s30, 0
    %p443 = por %p441, %p442
    %p444 = scmp.ne.s32.totalorder %s430, %s431
    %p445 = scmp.eq.s32.totalorder %s31, 3
    %p446 = por %p444, %p445
    %p448 = scmp.ne.s32.totalorder %s431, %s447
    %p449 = scmp.eq.s32.totalorder %s31, 0
    %p450 = por %p448, %p449
    %s452 = sadd.s32 %s451, 1
    %p455 = scmp.eq.s32.totalorder %s25, 3
    %p456 = scmp.ne.s32.totalorder %s451, %s453
    %p457 = scmp.eq.s32.totalorder %s25, 0
    %p458 = por %p456, %p457
    %p459 = scmp.ne.s32.totalorder %s451, %s453
    %p460 = scmp.eq.s32.totalorder %s30, 3
    %p461 = por %p459, %p460
    %p462 = scmp.ne.s32.totalorder %s453, %s454
    %p463 = scmp.eq.s32.totalorder %s30, 0
    %p464 = por %p462, %p463
    %p465 = scmp.ne.s32.totalorder %s453, %s454
    %p466 = scmp.eq.s32.totalorder %s31, 3
    %p467 = por %p465, %p466
    %p469 = scmp.ne.s32.totalorder %s454, %s468
    %p470 = scmp.eq.s32.totalorder %s31, 0
    %p471 = por %p469, %p470
    %s473 = sadd.s32 %s472, 1
    %p476 = scmp.eq.s32.totalorder %s25, 3
    %p477 = scmp.ne.s32.totalorder %s472, %s474
    %p478 = scmp.eq.s32.totalorder %s25, 0
    %p479 = por %p477, %p478
    %p480 = scmp.ne.s32.totalorder %s472, %s474
    %p481 = scmp.eq.s32.totalorder %s30, 3
    %p482 = por %p480, %p481
    %p483 = scmp.ne.s32.totalorder %s474, %s475
    %p484 = scmp.eq.s32.totalorder %s30, 0
    %p485 = por %p483, %p484
    %p486 = scmp.ne.s32.totalorder %s474, %s475
    %p487 = scmp.eq.s32.totalorder %s31, 3
    %p488 = por %p486, %p487
    %p490 = scmp.ne.s32.totalorder %s475, %s489
    %p491 = scmp.eq.s32.totalorder %s31, 0
    %p492 = por %p490, %p491
    %s494 = sadd.s32 %s493, 1
    %p497 = scmp.eq.s32.totalorder %s25, 3
    %p498 = scmp.ne.s32.totalorder %s493, %s495
    %p499 = scmp.eq.s32.totalorder %s25, 0
    %p500 = por %p498, %p499
    %p501 = scmp.ne.s32.totalorder %s493, %s495
    %p502 = scmp.eq.s32.totalorder %s30, 3
    %p503 = por %p501, %p502
    %p504 = scmp.ne.s32.totalorder %s495, %s496
    %p505 = scmp.eq.s32.totalorder %s30, 0
    %p506 = por %p504, %p505
    %p507 = scmp.ne.s32.totalorder %s495, %s496
    %p508 = scmp.eq.s32.totalorder %s31, 3
    %p509 = por %p507, %p508
    %p511 = scmp.ne.s32.totalorder %s496, %s510
    %p512 = scmp.eq.s32.totalorder %s31, 0
    %p513 = por %p511, %p512
    %s514 = ssub.s32 %s32, %s44
    %p515 = scmp.eq.s32.totalorder %s514, 0
    %s517 = sadd.s32 %s516, 1
    %s518 = scalar_select %p515, %s516, %s517
    %p521 = pneg %p515
    %p522 = scmp.eq.s32.totalorder %s25, 3
    %p523 = por %p521, %p522
    %p524 = scmp.ne.s32.totalorder %s516, %s519
    %p525 = scmp.eq.s32.totalorder %s25, 0
    %p526 = por %p524, %p525
    %p527 = scmp.ne.s32.totalorder %s516, %s519
    %p528 = scmp.eq.s32.totalorder %s30, 3
    %p529 = por %p527, %p528
    %p530 = scmp.ne.s32.totalorder %s519, %s520
    %p531 = scmp.eq.s32.totalorder %s30, 0
    %p532 = por %p530, %p531
    %p533 = scmp.ne.s32.totalorder %s519, %s520
    %p534 = scmp.eq.s32.totalorder %s31, 3
    %p535 = por %p533, %p534
    %p537 = scmp.ne.s32.totalorder %s520, %s536
    %p538 = scmp.eq.s32.totalorder %s31, 0
    %p539 = por %p537, %p538
    %p540 = scmp.le.s32.totalorder 1, %s25
    %p541 = scmp.lt.s32.totalorder %s25, 5
    %p542 = pnand %p540, %p541
    %p543 = pneg %p542
    // Predicated region
    $region9: #{roberta_for_latent_forward.1} parent=5 // pred_check
      _
    $region10: #{roberta_for_latent_forward.1} parent=5 // pred_check_branch
      %545 = sbr.rel (%p542) target = $region12
    $region11: #{roberta_for_latent_forward.1} parent=5 // pred_region
      %s546 = ssub.s32 %s25, 1
      // Predicated region
      $region13: #{roberta_for_latent_forward.1} parent=11 // pred_check
        %p547 = pneg %p110
      $region14: #{roberta_for_latent_forward.1} parent=11 // pred_check_branch
        %549 = sbr.rel (%p547) target = $region16
      $region15: #{roberta_for_latent_forward.1} parent=11 // pred_region
        _
      $region16: #{roberta_for_latent_forward.1} parent=11 // pred_fallthru
        _
      // Predicated region
      $region17: #{roberta_for_latent_forward.1} parent=11 // pred_check
        %p550 = pneg %p131
      $region18: #{roberta_for_latent_forward.1} parent=11 // pred_check_branch
        %552 = sbr.rel (%p550) target = $region20
      $region19: #{roberta_for_latent_forward.1} parent=11 // pred_region
        _
      $region20: #{roberta_for_latent_forward.1} parent=11 // pred_fallthru
        _
      // Predicated region
      $region21: #{roberta_for_latent_forward.1} parent=11 // pred_check
        %p553 = pneg %p464
      $region22: #{roberta_for_latent_forward.1} parent=11 // pred_check_branch
        %555 = sbr.rel (%p553) target = $region24
      $region23: #{roberta_for_latent_forward.1} parent=11 // pred_region
        _
      $region24: #{roberta_for_latent_forward.1} parent=11 // pred_fallthru
        _
      // Predicated region
      $region25: #{roberta_for_latent_forward.1} parent=11 // pred_check
        %p556 = pneg %p485
      $region26: #{roberta_for_latent_forward.1} parent=11 // pred_check_branch
        %558 = sbr.rel (%p556) target = $region28
      $region27: #{roberta_for_latent_forward.1} parent=11 // pred_region
        _
      $region28: #{roberta_for_latent_forward.1} parent=11 // pred_fallthru
        _
      // Predicated region
      $region29: #{roberta_for_latent_forward.1} parent=11 // pred_check
        %p559 = pneg %p506
      $region30: #{roberta_for_latent_forward.1} parent=11 // pred_check_branch
        %561 = sbr.rel (%p559) target = $region32
      $region31: #{roberta_for_latent_forward.1} parent=11 // pred_region
        _
      $region32: #{roberta_for_latent_forward.1} parent=11 // pred_fallthru
        _
    $region12: #{roberta_for_latent_forward.1} parent=5 // pred_fallthru
      _
    %p562 = scmp.lt.s32.totalorder %s25, 4
    // Predicated region
    $region33: #{roberta_for_latent_forward.1} parent=5 // pred_check
      %p563 = pneg %p562
    $region34: #{roberta_for_latent_forward.1} parent=5 // pred_check_branch
      %565 = sbr.rel (%p563) target = $region36
    $region35: #{roberta_for_latent_forward.1} parent=5 // pred_region
      // Predicated region
      $region37: #{roberta_for_latent_forward.1} parent=35 // pred_check
        %p566 = pneg %p57
      $region38: #{roberta_for_latent_forward.1} parent=35 // pred_check_branch
        %568 = sbr.rel (%p566) target = $region40
      $region39: #{roberta_for_latent_forward.1} parent=35 // pred_region
        %p569 = scmp.lt.s32.totalorder %s32, 1
        %s570 = scalar_select %p569, %s32, 1
        %s571 = smul.addr %s570, 8
        %s572 = scalar_lea.vmem %s0, %s571
      $region40: #{roberta_for_latent_forward.1} parent=35 // pred_fallthru
        _
      // Predicated region
      $region41: #{roberta_for_latent_forward.1} parent=35 // pred_check
        %p573 = pneg %p83
      $region42: #{roberta_for_latent_forward.1} parent=35 // pred_check_branch
        %575 = sbr.rel (%p573) target = $region44
      $region43: #{roberta_for_latent_forward.1} parent=35 // pred_region
        %p576 = scmp.lt.s32.totalorder %s32, 1
        %s577 = scalar_select %p576, %s32, 1
        %s578 = scalar_lea.vmem %s1, %s577
      $region44: #{roberta_for_latent_forward.1} parent=35 // pred_fallthru
        _
      // Predicated region
      $region45: #{roberta_for_latent_forward.1} parent=35 // pred_check
        %p579 = pneg %p151
      $region46: #{roberta_for_latent_forward.1} parent=35 // pred_check_branch
        %581 = sbr.rel (%p579) target = $region48
      $region47: #{roberta_for_latent_forward.1} parent=35 // pred_region
        %p582 = scmp.lt.s32.totalorder %s33, 1
        %s583 = scalar_select %p582, %s33, 1
        %s584 = smul.addr %s583, 4
        %s585 = smul.addr %s584, 4
        %s586 = scalar_lea.vmem %s4, %s585
      $region48: #{roberta_for_latent_forward.1} parent=35 // pred_fallthru
        _
      // Predicated region
      $region49: #{roberta_for_latent_forward.1} parent=35 // pred_check
        %p587 = pneg %p177
      $region50: #{roberta_for_latent_forward.1} parent=35 // pred_check_branch
        %589 = sbr.rel (%p587) target = $region52
      $region51: #{roberta_for_latent_forward.1} parent=35 // pred_region
        %p590 = scmp.lt.s32.totalorder %s33, 1
        %s591 = scalar_select %p590, %s33, 1
        %s592 = scalar_lea.vmem %s5, %s591
      $region52: #{roberta_for_latent_forward.1} parent=35 // pred_fallthru
        _
      // Predicated region
      $region53: #{roberta_for_latent_forward.1} parent=35 // pred_check
        %p593 = pneg %p203
      $region54: #{roberta_for_latent_forward.1} parent=35 // pred_check_branch
        %595 = sbr.rel (%p593) target = $region56
      $region55: #{roberta_for_latent_forward.1} parent=35 // pred_region
        %p596 = scmp.lt.s32.totalorder %s33, 1
        %s597 = scalar_select %p596, %s33, 1
        %s598 = smul.addr %s597, 4
        %s599 = smul.addr %s598, 4
        %s600 = scalar_lea.vmem %s6, %s599
      $region56: #{roberta_for_latent_forward.1} parent=35 // pred_fallthru
        _
      // Predicated region
      $region57: #{roberta_for_latent_forward.1} parent=35 // pred_check
        %p601 = pneg %p229
      $region58: #{roberta_for_latent_forward.1} parent=35 // pred_check_branch
        %603 = sbr.rel (%p601) target = $region60
      $region59: #{roberta_for_latent_forward.1} parent=35 // pred_region
        %p604 = scmp.lt.s32.totalorder %s33, 1
        %s605 = scalar_select %p604, %s33, 1
        %s606 = scalar_lea.vmem %s7, %s605
      $region60: #{roberta_for_latent_forward.1} parent=35 // pred_fallthru
        _
      // Predicated region
      $region61: #{roberta_for_latent_forward.1} parent=35 // pred_check
        %p607 = pneg %p255
      $region62: #{roberta_for_latent_forward.1} parent=35 // pred_check_branch
        %609 = sbr.rel (%p607) target = $region64
      $region63: #{roberta_for_latent_forward.1} parent=35 // pred_region
        %p610 = scmp.lt.s32.totalorder %s33, 1
        %s611 = scalar_select %p610, %s33, 1
        %s612 = scalar_lea.vmem %s8, %s611
      $region64: #{roberta_for_latent_forward.1} parent=35 // pred_fallthru
        _
      // Predicated region
      $region65: #{roberta_for_latent_forward.1} parent=35 // pred_check
        %p613 = pneg %p281
      $region66: #{roberta_for_latent_forward.1} parent=35 // pred_check_branch
        %615 = sbr.rel (%p613) target = $region68
      $region67: #{roberta_for_latent_forward.1} parent=35 // pred_region
        %p616 = scmp.lt.s32.totalorder %s33, 1
        %s617 = scalar_select %p616, %s33, 1
        %s618 = scalar_lea.vmem %s9, %s617
      $region68: #{roberta_for_latent_forward.1} parent=35 // pred_fallthru
        _
      // Predicated region
      $region69: #{roberta_for_latent_forward.1} parent=35 // pred_check
        %p619 = pneg %p307
      $region70: #{roberta_for_latent_forward.1} parent=35 // pred_check_branch
        %621 = sbr.rel (%p619) target = $region72
      $region71: #{roberta_for_latent_forward.1} parent=35 // pred_region
        %p622 = scmp.lt.s32.totalorder %s33, 1
        %s623 = scalar_select %p622, %s33, 1
        %s624 = smul.addr %s623, 4
        %s625 = smul.addr %s624, 4
        %s626 = scalar_lea.vmem %s10, %s625
      $region72: #{roberta_for_latent_forward.1} parent=35 // pred_fallthru
        _
      // Predicated region
      $region73: #{roberta_for_latent_forward.1} parent=35 // pred_check
        %p627 = pneg %p333
      $region74: #{roberta_for_latent_forward.1} parent=35 // pred_check_branch
        %629 = sbr.rel (%p627) target = $region76
      $region75: #{roberta_for_latent_forward.1} parent=35 // pred_region
        %p630 = scmp.lt.s32.totalorder %s33, 1
        %s631 = scalar_select %p630, %s33, 1
        %s632 = scalar_lea.vmem %s11, %s631
      $region76: #{roberta_for_latent_forward.1} parent=35 // pred_fallthru
        _
      // Predicated region
      $region77: #{roberta_for_latent_forward.1} parent=35 // pred_check
        %p633 = pneg %p359
      $region78: #{roberta_for_latent_forward.1} parent=35 // pred_check_branch
        %635 = sbr.rel (%p633) target = $region80
      $region79: #{roberta_for_latent_forward.1} parent=35 // pred_region
        %p636 = scmp.lt.s32.totalorder %s33, 1
        %s637 = scalar_select %p636, %s33, 1
        %s638 = smul.addr %s637, 8
        %s639 = smul.addr %s638, 4
        %s640 = scalar_lea.vmem %s12, %s639
      $region80: #{roberta_for_latent_forward.1} parent=35 // pred_fallthru
        _
      // Predicated region
      $region81: #{roberta_for_latent_forward.1} parent=35 // pred_check
        %p641 = pneg %p385
      $region82: #{roberta_for_latent_forward.1} parent=35 // pred_check_branch
        %643 = sbr.rel (%p641) target = $region84
      $region83: #{roberta_for_latent_forward.1} parent=35 // pred_region
        %p644 = scmp.lt.s32.totalorder %s33, 1
        %s645 = scalar_select %p644, %s33, 1
        %s646 = scalar_lea.vmem %s13, %s645
      $region84: #{roberta_for_latent_forward.1} parent=35 // pred_fallthru
        _
      // Predicated region
      $region85: #{roberta_for_latent_forward.1} parent=35 // pred_check
        %p647 = pneg %p411
      $region86: #{roberta_for_latent_forward.1} parent=35 // pred_check_branch
        %649 = sbr.rel (%p647) target = $region88
      $region87: #{roberta_for_latent_forward.1} parent=35 // pred_region
        %p650 = scmp.lt.s32.totalorder %s33, 1
        %s651 = scalar_select %p650, %s33, 1
        %s652 = scalar_lea.vmem %s14, %s651
      $region88: #{roberta_for_latent_forward.1} parent=35 // pred_fallthru
        _
      // Predicated region
      $region89: #{roberta_for_latent_forward.1} parent=35 // pred_check
        %p653 = pneg %p437
      $region90: #{roberta_for_latent_forward.1} parent=35 // pred_check_branch
        %655 = sbr.rel (%p653) target = $region92
      $region91: #{roberta_for_latent_forward.1} parent=35 // pred_region
        %p656 = scmp.lt.s32.totalorder %s33, 1
        %s657 = scalar_select %p656, %s33, 1
        %s658 = scalar_lea.vmem %s15, %s657
      $region92: #{roberta_for_latent_forward.1} parent=35 // pred_fallthru
        _
    $region36: #{roberta_for_latent_forward.1} parent=5 // pred_fallthru
      _
    %p659 = scmp.le.s32.totalorder 1, %s25
    %p660 = scmp.lt.s32.totalorder %s25, 5
    %p661 = pnand %p659, %p660
    %p662 = pneg %p661
    // Predicated region
    $region93: #{roberta_for_latent_forward.1} parent=5 // pred_check
      _
    $region94: #{roberta_for_latent_forward.1} parent=5 // pred_check_branch
      %664 = sbr.rel (%p661) target = $region96
    $region95: #{roberta_for_latent_forward.1} parent=5 // pred_region
      %s665 = ssub.s32 %s25, 1
      %p666 = scmp.lt.s32.totalorder %s34, 1
      %s667 = scalar_select %p666, %s34, 1
      %s668 = smul.addr %s667, 8
      %s669 = scalar_lea.vmem %s0, %s668
      %p670 = pneg %p63
      %p671 = pneg %p60
      %p672 = scmp.lt.s32.totalorder %s34, 1
      %s673 = scalar_select %p672, %s34, 1
      %s674 = scalar_lea.vmem %s1, %s673
      %p675 = pneg %p89
      %p676 = pneg %p86
      %p677 = pneg %p110
      %p678 = pneg %p107
      %p679 = pneg %p131
      %p680 = pneg %p128
      %p681 = scmp.lt.s32.totalorder %s35, 1
      %s682 = scalar_select %p681, %s35, 1
      %s683 = smul.addr %s682, 4
      %s684 = smul.addr %s683, 4
      %s685 = scalar_lea.vmem %s4, %s684
      %p686 = pneg %p157
      %p687 = pneg %p154
      %p688 = scmp.lt.s32.totalorder %s35, 1
      %s689 = scalar_select %p688, %s35, 1
      %s690 = scalar_lea.vmem %s5, %s689
      %p691 = pneg %p183
      %p692 = pneg %p180
      %p693 = scmp.lt.s32.totalorder %s35, 1
      %s694 = scalar_select %p693, %s35, 1
      %s695 = smul.addr %s694, 4
      %s696 = smul.addr %s695, 4
      %s697 = scalar_lea.vmem %s6, %s696
      %p698 = pneg %p209
      %p699 = pneg %p206
      %p700 = scmp.lt.s32.totalorder %s35, 1
      %s701 = scalar_select %p700, %s35, 1
      %s702 = scalar_lea.vmem %s7, %s701
      %p703 = pneg %p235
      %p704 = pneg %p232
      %p705 = scmp.lt.s32.totalorder %s35, 1
      %s706 = scalar_select %p705, %s35, 1
      %s707 = scalar_lea.vmem %s8, %s706
      %p708 = pneg %p261
      %p709 = pneg %p258
      %p710 = scmp.lt.s32.totalorder %s35, 1
      %s711 = scalar_select %p710, %s35, 1
      %s712 = scalar_lea.vmem %s9, %s711
      %p713 = pneg %p287
      %p714 = pneg %p284
      %p715 = scmp.lt.s32.totalorder %s35, 1
      %s716 = scalar_select %p715, %s35, 1
      %s717 = smul.addr %s716, 4
      %s718 = smul.addr %s717, 4
      %s719 = scalar_lea.vmem %s10, %s718
      %p720 = pneg %p313
      %p721 = pneg %p310
      %p722 = scmp.lt.s32.totalorder %s35, 1
      %s723 = scalar_select %p722, %s35, 1
      %s724 = scalar_lea.vmem %s11, %s723
      %p725 = pneg %p339
      %p726 = pneg %p336
      %p727 = scmp.lt.s32.totalorder %s35, 1
      %s728 = scalar_select %p727, %s35, 1
      %s729 = smul.addr %s728, 8
      %s730 = smul.addr %s729, 4
      %s731 = scalar_lea.vmem %s12, %s730
      %p732 = pneg %p365
      %p733 = pneg %p362
      %p734 = scmp.lt.s32.totalorder %s35, 1
      %s735 = scalar_select %p734, %s35, 1
      %s736 = scalar_lea.vmem %s13, %s735
      %p737 = pneg %p391
      %p738 = pneg %p388
      %p739 = scmp.lt.s32.totalorder %s35, 1
      %s740 = scalar_select %p739, %s35, 1
      %s741 = scalar_lea.vmem %s14, %s740
      %p742 = pneg %p417
      %p743 = pneg %p414
      %p744 = scmp.lt.s32.totalorder %s35, 1
      %s745 = scalar_select %p744, %s35, 1
      %s746 = scalar_lea.vmem %s15, %s745
      %p747 = pneg %p443
      %p748 = pneg %p440
      %p749 = pneg %p464
      %p750 = pneg %p461
      %p751 = pneg %p485
      %p752 = pneg %p482
      %p753 = pneg %p506
      %p754 = pneg %p503
      %p755 = pneg %p532
      %p756 = pneg %p529
      %p757 = scmp.lt.s32.totalorder %s34, 1
      %s758 = scalar_select %p757, %s34, 1
      %s759 = scalar_lea.vmem %s19, %s758
      %p760 = scmp.lt.s32.totalorder %s34, 1
      %s761 = scalar_select %p760, %s34, 1
      %s762 = smul.addr %s761, 8
      %s763 = scalar_lea.vmem %s0, %s762
      %p764 = scmp.lt.s32.totalorder %s34, 1
      %s765 = scalar_select %p764, %s34, 1
      %s766 = scalar_lea.vmem %s1, %s765
      %p767 = scmp.lt.s32.totalorder %s35, 1
      %s768 = scalar_select %p767, %s35, 1
      %s769 = smul.addr %s768, 4
      %s770 = smul.addr %s769, 4
      %s771 = scalar_lea.vmem %s4, %s770
      %p772 = scmp.lt.s32.totalorder %s35, 1
      %s773 = scalar_select %p772, %s35, 1
      %s774 = scalar_lea.vmem %s5, %s773
      %p775 = scmp.lt.s32.totalorder %s35, 1
      %s776 = scalar_select %p775, %s35, 1
      %s777 = smul.addr %s776, 4
      %s778 = smul.addr %s777, 4
      %s779 = scalar_lea.vmem %s6, %s778
      %p780 = scmp.lt.s32.totalorder %s35, 1
      %s781 = scalar_select %p780, %s35, 1
      %s782 = scalar_lea.vmem %s7, %s781
      %p783 = scmp.lt.s32.totalorder %s35, 1
      %s784 = scalar_select %p783, %s35, 1
      %s785 = scalar_lea.vmem %s8, %s784
      %p786 = scmp.lt.s32.totalorder %s35, 1
      %s787 = scalar_select %p786, %s35, 1
      %s788 = scalar_lea.vmem %s9, %s787
      %p789 = scmp.lt.s32.totalorder %s35, 1
      %s790 = scalar_select %p789, %s35, 1
      %s791 = smul.addr %s790, 4
      %s792 = smul.addr %s791, 4
      %s793 = scalar_lea.vmem %s10, %s792
      %p794 = scmp.lt.s32.totalorder %s35, 1
      %s795 = scalar_select %p794, %s35, 1
      %s796 = scalar_lea.vmem %s11, %s795
      %p797 = scmp.lt.s32.totalorder %s35, 1
      %s798 = scalar_select %p797, %s35, 1
      %s799 = smul.addr %s798, 8
      %s800 = smul.addr %s799, 4
      %s801 = scalar_lea.vmem %s12, %s800
      %p802 = scmp.lt.s32.totalorder %s35, 1
      %s803 = scalar_select %p802, %s35, 1
      %s804 = scalar_lea.vmem %s13, %s803
      %p805 = scmp.lt.s32.totalorder %s35, 1
      %s806 = scalar_select %p805, %s35, 1
      %s807 = scalar_lea.vmem %s14, %s806
      %p808 = scmp.lt.s32.totalorder %s35, 1
      %s809 = scalar_select %p808, %s35, 1
      %s810 = scalar_lea.vmem %s15, %s809
      %p811 = scmp.lt.s32.totalorder %s34, 1
      %s812 = scalar_select %p811, %s34, 1
      %s813 = scalar_lea.vmem %s19, %s812
      %p815 = scmp.eq.s32.totalorder %s35, 0
      // Predicated region
      $region97: #{roberta_for_latent_forward.1} parent=95 // pred_check
        %p816 = pneg %p815
      $region98: #{roberta_for_latent_forward.1} parent=95 // pred_check_branch
        %818 = sbr.rel (%p816) target = $region100
      $region99: #{roberta_for_latent_forward.1} parent=95 // pred_region
        %v819 = vld [vmem:[%s763] sm:$0xff]
        %v820 = vld [vmem:[%s2] sm:$0x1]
        %v821 = vld [vmem:[%s3] sm:$0x1]
        %vm822 = vcmask 261120
        %v823 = vsel %vm822, %v819, 0.0
        %824 = vadd.xlane.f32.xlu0 %v823
        %v825 = vpop.xlane.xlu0 %824
        %v826 = vrcp.pop 32.0
        %v827 = vmul.f32 32.0, %v826
        %v828 = vsub.f32 1.0, %v827
        %v829 = vmul.f32 %v826, %v828
        %v830 = vadd.f32 %v826, %v829
        %vm831 = vweird.f32 %v826
        %v832 = vsel %vm831, %v826, %v830
        %v833 = vmul.f32 %v825, %v832
        %v834 = vsub.f32 %v819, %v833
        %v835 = vmul.f32 %v834, %v834
        %v836 = vsel %vm822, %v835, 0.0
        %837 = vadd.xlane.f32.xlu0 %v836
        %v838 = vpop.xlane.xlu0 %837
        %v839 = vmul.f32 %v838, %v832
        %v840 = vadd.f32 %v839, 1e-05
        %v841 = vrsqrt.pop %v840
        %v842 = vmul.f32 %v841, %v840
        %v843 = vmul.f32 %v842, %v841
        %v844 = vmul.f32 0.5, %v843
        %v845 = vsub.f32 1.5, %v844
        %v846 = vmul.f32 %v841, %v845
        %vm847 = vweird.f32 %v840
        %vm848 = vweird.f32 %v841
        %vm849 = vmor %vm847, %vm848
        %v850 = vsel %vm849, %v841, %v846
        %v851 = vmul.f32 %v834, %v850
        %v853 = vperm.slane %v820, 0
        %v855 = vmul.f32 %v851, %v853
        %v857 = vperm.slane %v821, 0
        %v859 = vadd.f32 %v855, %v857
        %860 = vst.msk [vmem:[#allocation2] sm:$0xff] %vm822, %v859
      $region100: #{roberta_for_latent_forward.1} parent=95 // pred_fallthru
        _
      %v861 = vld [vmem:[#allocation2] sm:$0xff]
      %v862 = vld [vmem:[%s766] sm:$0x1]
      %vm863 = vcmp.gt.f32.partialorder %v862, 0.0
      %v864 = vsel %vm863, 0.0, -1e+09
      %v865 = vpack.c.bf16 %v861, %v861
      %v866 = vld [vmem:[%s771] sm:$0xf]
      %v867 = vld [vmem:[%s771 + $0x4] sm:$0xf]
      %v868 = vld [vmem:[%s771 + $0x8] sm:$0xf]
      %v869 = vld [vmem:[%s771 + $0xc] sm:$0xf]
      %v870 = vld [vmem:[%s774] sm:$0x1]
      %v872 = vperm.slane %v870, 0
      %v878 = vunpack.c.l.b16 %v866
      %v879 = vunpack.c.l.b16 %v867
      %v880 = vunpack.c.l.b16 %v868
      %v881 = vunpack.c.l.b16 %v869
      %v882 = vpack.c.b16 %v879, %v878
      %v883 = vpack.c.b16 %v881, %v880
      %vm886 = vcmask 261120
      %v888 = vsel %vm886, %v865, 0
      %890 = vmatpush.bf16.msra.mxu0 0
      %891 = vmatpush.bf16.msra.mxu0 0
      %892 = vmatpush.bf16.msra.mxu0 0
      %893 = vmatpush.bf16.msra.mxu0 0
      %894 = vmatpush.bf16.msra.mxu0 0
      %895 = vmatpush.bf16.msra.mxu0 0
      %896 = vmatpush.bf16.msra.mxu0 %v883
      %897 = vmatpush.bf16.msra.mxu0 %v882
      %898 = vmatmul.bf16.gmra.mxu0 %v888
      %v899 = vpop.f32.mrf.mxu0
      %v900 = vadd.f32 %v872, %v899
      %v901 = vpop.f32.mrf.mxu0
      %902 = vdwg.mxu0
      %v903 = vmul.f32 %v900, 0.25
      %v904 = vpack.c.bf16 %v903, %v903
      %v905 = vpack.c.bf16 %v900, %v900
      %v907 = vperm.slane %v864, 0
      %910 = vrot.lane.b32.xlu0 %v905, 96
      %v911 = vpop.permute.xlu0 %910
      %vm912 = vcmask 130048
      %v914 = vsel %vm912, %v904, 0
      %v917 = vsel %vm912, %v911, 0
      %919 = vmatpush.bf16.xpose.msra.mxu0 0
      %920 = vmatpush.bf16.xpose.msra.mxu0 0
      %921 = vmatpush.bf16.xpose.msra.mxu0 0
      %922 = vmatpush.bf16.xpose.msra.mxu0 0
      %923 = vmatpush.bf16.xpose.msra.mxu0 0
      %924 = vmatpush.bf16.xpose.msra.mxu0 0
      %925 = vmatpush.bf16.xpose.msra.mxu0 0
      %926 = vmatpush.bf16.xpose.msra.mxu0 %v917
      %927 = vmatmul.bf16.gmra.mxu0 %v914
      %v928 = vpop.f32.mrf.mxu0
      %v929 = vadd.f32 %v907, %v928
      %v930 = vpop.f32.mrf.mxu0
      %931 = vdwg.mxu0
      %vm932 = vcmask 64512
      %v933 = vsel %vm932, %v929, -inf
      %934 = vmax.xlane.f32.xlu0 %v933
      %v935 = vpop.xlane.xlu0 %934
      %v936 = vsub.f32 %v929, %v935
      %v937 = vmul.f32 %v936, 1.442695
      %v938 = vpow.pop %v937
      %v939 = vsel %vm932, %v938, 0.0
      %940 = vadd.xlane.f32.xlu0 %v939
      %v941 = vpop.xlane.xlu0 %940
      %v942 = vrcp.pop %v941
      %v943 = vmul.f32 %v938, %v942
      %v944 = vpack.c.bf16 %v943, %v943
      %945 = vrot.lane.b32.xlu0 %v905, 64
      %v946 = vpop.permute.xlu0 %945
      %v948 = vsel %vm932, %v944, 0
      %vm950 = vcmask 1043456
      %v952 = vsel %vm950, %v946, 0
      %954 = vmatpush.bf16.msra.mxu0 0
      %955 = vmatpush.bf16.msra.mxu0 0
      %956 = vmatpush.bf16.msra.mxu0 0
      %957 = vmatpush.bf16.msra.mxu0 0
      %958 = vmatpush.bf16.msra.mxu0 0
      %959 = vmatpush.bf16.msra.mxu0 0
      %960 = vmatpush.bf16.msra.mxu0 0
      %961 = vmatpush.bf16.msra.mxu0 %v952
      %962 = vmatmul.bf16.gmra.mxu0 %v948
      %v963 = vpop.f32.mrf.mxu0
      %v964 = vadd.f32 0.0, %v963
      %v965 = vpop.f32.mrf.mxu0
      %966 = vdwg.mxu0
      %v967 = vpack.c.bf16 %v964, %v964
      %vm968 = vcmask 125952
      %969 = vst.msk [vmem:[#allocation3] sm:$0xf] %vm968, %v967
      %971 = vrot.lane.b32.xlu0 %v904, 112
      %v972 = vpop.permute.xlu0 %971
      %973 = vrot.lane.b32.xlu0 %v905, 80
      %v974 = vpop.permute.xlu0 %973
      %v976 = vsel %vm912, %v972, 0
      %v979 = vsel %vm912, %v974, 0
      %981 = vmatpush.bf16.xpose.msra.mxu0 0
      %982 = vmatpush.bf16.xpose.msra.mxu0 0
      %983 = vmatpush.bf16.xpose.msra.mxu0 0
      %984 = vmatpush.bf16.xpose.msra.mxu0 0
      %985 = vmatpush.bf16.xpose.msra.mxu0 0
      %986 = vmatpush.bf16.xpose.msra.mxu0 0
      %987 = vmatpush.bf16.xpose.msra.mxu0 0
      %988 = vmatpush.bf16.xpose.msra.mxu0 %v979
      %989 = vmatmul.bf16.gmra.mxu0 %v976
      %v990 = vpop.f32.mrf.mxu0
      %v991 = vadd.f32 %v907, %v990
      %v992 = vpop.f32.mrf.mxu0
      %993 = vdwg.mxu0
      %v994 = vsel %vm932, %v991, -inf
      %995 = vmax.xlane.f32.xlu0 %v994
      %v996 = vpop.xlane.xlu0 %995
      %v997 = vsub.f32 %v991, %v996
      %v998 = vmul.f32 %v997, 1.442695
      %v999 = vpow.pop %v998
      %v1000 = vsel %vm932, %v999, 0.0
      %1001 = vadd.xlane.f32.xlu0 %v1000
      %v1002 = vpop.xlane.xlu0 %1001
      %v1003 = vrcp.pop %v1002
      %v1004 = vmul.f32 %v999, %v1003
      %v1005 = vpack.c.bf16 %v1004, %v1004
      %1006 = vrot.lane.b32.xlu0 %v905, 48
      %v1007 = vpop.permute.xlu0 %1006
      %v1009 = vsel %vm932, %v1005, 0
      %v1012 = vsel %vm950, %v1007, 0
      %1014 = vmatpush.bf16.msra.mxu0 0
      %1015 = vmatpush.bf16.msra.mxu0 0
      %1016 = vmatpush.bf16.msra.mxu0 0
      %1017 = vmatpush.bf16.msra.mxu0 0
      %1018 = vmatpush.bf16.msra.mxu0 0
      %1019 = vmatpush.bf16.msra.mxu0 0
      %1020 = vmatpush.bf16.msra.mxu0 0
      %1021 = vmatpush.bf16.msra.mxu0 %v1012
      %1022 = vmatmul.bf16.gmra.mxu0 %v1009
      %v1023 = vpop.f32.mrf.mxu0
      %v1024 = vadd.f32 0.0, %v1023
      %v1025 = vpop.f32.mrf.mxu0
      %1026 = vdwg.mxu0
      %v1027 = vpack.c.bf16 %v1024, %v1024
      %1029 = vrot.lane.b32.xlu0 %v1027, 16
      %v1030 = vpop.permute.xlu0 %1029
      %vm1032 = vcmask 257152
      %1033 = vst.msk [vmem:[#allocation3] sm:$0xf] %vm1032, %v1030
      %v1034 = vld [vmem:[#allocation3] sm:$0xf]
      %v1035 = vld [vmem:[%s779] sm:$0xf]
      %v1036 = vld [vmem:[%s779 + $0x4] sm:$0xf]
      %v1037 = vld [vmem:[%s779 + $0x8] sm:$0xf]
      %v1038 = vld [vmem:[%s779 + $0xc] sm:$0xf]
      %v1039 = vld [vmem:[%s782] sm:$0x1]
      %v1041 = vperm.slane %v1039, 0
      %v1047 = vunpack.c.l.b16 %v1035
      %v1048 = vunpack.c.l.b16 %v1036
      %v1049 = vunpack.c.l.b16 %v1037
      %v1050 = vunpack.c.l.b16 %v1038
      %v1051 = vpack.c.b16 %v1048, %v1047
      %v1052 = vpack.c.b16 %v1050, %v1049
      %v1056 = vsel %vm886, %v1034, 0
      %1058 = vmatpush.bf16.msra.mxu0 0
      %1059 = vmatpush.bf16.msra.mxu0 0
      %1060 = vmatpush.bf16.msra.mxu0 0
      %1061 = vmatpush.bf16.msra.mxu0 0
      %1062 = vmatpush.bf16.msra.mxu0 0
      %1063 = vmatpush.bf16.msra.mxu0 0
      %1064 = vmatpush.bf16.msra.mxu0 %v1052
      %1065 = vmatpush.bf16.msra.mxu0 %v1051
      %1066 = vmatmul.bf16.gmra.mxu0 %v1056
      %v1067 = vpop.f32.mrf.mxu0
      %v1068 = vadd.f32 %v1041, %v1067
      %v1069 = vpop.f32.mrf.mxu0
      %1070 = vdwg.mxu0
      %v1071 = vadd.f32 %v1068, %v861
      %v1072 = vld [vmem:[%s785] sm:$0x1]
      %v1073 = vld [vmem:[%s788] sm:$0x1]
      %v1074 = vsel %vm886, %v1071, 0.0
      %1075 = vadd.xlane.f32.xlu0 %v1074
      %v1076 = vpop.xlane.xlu0 %1075
      %v1077 = vrcp.pop 32.0
      %v1078 = vmul.f32 32.0, %v1077
      %v1079 = vsub.f32 1.0, %v1078
      %v1080 = vmul.f32 %v1077, %v1079
      %v1081 = vadd.f32 %v1077, %v1080
      %vm1082 = vweird.f32 %v1077
      %v1083 = vsel %vm1082, %v1077, %v1081
      %v1084 = vmul.f32 %v1076, %v1083
      %v1085 = vsub.f32 %v1071, %v1084
      %v1086 = vmul.f32 %v1085, %v1085
      %v1087 = vsel %vm886, %v1086, 0.0
      %1088 = vadd.xlane.f32.xlu0 %v1087
      %v1089 = vpop.xlane.xlu0 %1088
      %v1090 = vmul.f32 %v1089, %v1083
      %v1091 = vadd.f32 %v1090, 1e-05
      %v1092 = vrsqrt.pop %v1091
      %v1093 = vmul.f32 %v1092, %v1091
      %v1094 = vmul.f32 %v1093, %v1092
      %v1095 = vmul.f32 0.5, %v1094
      %v1096 = vsub.f32 1.5, %v1095
      %v1097 = vmul.f32 %v1092, %v1096
      %vm1098 = vweird.f32 %v1091
      %vm1099 = vweird.f32 %v1092
      %vm1100 = vmor %vm1098, %vm1099
      %v1101 = vsel %vm1100, %v1092, %v1097
      %v1102 = vmul.f32 %v1085, %v1101
      %v1104 = vperm.slane %v1072, 0
      %v1106 = vmul.f32 %v1102, %v1104
      %v1108 = vperm.slane %v1073, 0
      %v1110 = vadd.f32 %v1106, %v1108
      %v1111 = vpack.c.bf16 %v1110, %v1110
      %v1112 = vld [vmem:[%s793] sm:$0xf]
      %v1113 = vld [vmem:[%s793 + $0x4] sm:$0xf]
      %v1114 = vld [vmem:[%s793 + $0x8] sm:$0xf]
      %v1115 = vld [vmem:[%s793 + $0xc] sm:$0xf]
      %v1116 = vld [vmem:[%s796] sm:$0x1]
      %v1118 = vperm.slane %v1116, 0
      %v1124 = vunpack.c.l.b16 %v1112
      %v1125 = vunpack.c.l.b16 %v1113
      %v1126 = vunpack.c.l.b16 %v1114
      %v1127 = vunpack.c.l.b16 %v1115
      %v1128 = vpack.c.b16 %v1125, %v1124
      %v1129 = vpack.c.b16 %v1127, %v1126
      %v1133 = vsel %vm886, %v1111, 0
      %1135 = vmatpush.bf16.msra.mxu0 0
      %1136 = vmatpush.bf16.msra.mxu0 0
      %1137 = vmatpush.bf16.msra.mxu0 0
      %1138 = vmatpush.bf16.msra.mxu0 0
      %1139 = vmatpush.bf16.msra.mxu0 0
      %1140 = vmatpush.bf16.msra.mxu0 0
      %1141 = vmatpush.bf16.msra.mxu0 %v1129
      %1142 = vmatpush.bf16.msra.mxu0 %v1128
      %1143 = vmatmul.bf16.gmra.mxu0 %v1133
      %v1144 = vpop.f32.mrf.mxu0
      %v1145 = vadd.f32 %v1118, %v1144
      %v1146 = vpop.f32.mrf.mxu0
      %1147 = vdwg.mxu0
      %v1148 = vmul.f32 %v1145, %v1145
      %v1149 = vmul.f32 %v1145, %v1148
      %v1150 = vmul.f32 %v1149, 0.044715
      %v1151 = vadd.f32 %v1145, %v1150
      %v1152 = vmul.f32 %v1151, 0.7978846
      %v1153 = vtanh.pop %v1152
      %v1154 = vadd.f32 %v1153, 1.0
      %v1155 = vmul.f32 %v1154, 0.5
      %v1156 = vmul.f32 %v1145, %v1155
      %v1157 = vpack.c.bf16 %v1156, %v1156
      %v1158 = vld [vmem:[%s801] sm:$0xf]
      %v1159 = vld [vmem:[%s801 + $0x4] sm:$0xf]
      %v1160 = vld [vmem:[%s801 + $0x8] sm:$0xf]
      %v1161 = vld [vmem:[%s801 + $0xc] sm:$0xf]
      %v1162 = vld [vmem:[%s801 + $0x10] sm:$0xf]
      %v1163 = vld [vmem:[%s801 + $0x14] sm:$0xf]
      %v1164 = vld [vmem:[%s801 + $0x18] sm:$0xf]
      %v1165 = vld [vmem:[%s801 + $0x1c] sm:$0xf]
      %v1166 = vld [vmem:[%s804] sm:$0x1]
      %v1168 = vperm.slane %v1166, 0
      %v1178 = vunpack.c.l.b16 %v1158
      %v1179 = vunpack.c.l.b16 %v1159
      %v1180 = vunpack.c.l.b16 %v1160
      %v1181 = vunpack.c.l.b16 %v1161
      %v1182 = vunpack.c.l.b16 %v1162
      %v1183 = vunpack.c.l.b16 %v1163
      %v1184 = vunpack.c.l.b16 %v1164
      %v1185 = vunpack.c.l.b16 %v1165
      %v1186 = vpack.c.b16 %v1179, %v1178
      %v1187 = vpack.c.b16 %v1181, %v1180
      %v1188 = vpack.c.b16 %v1183, %v1182
      %v1189 = vpack.c.b16 %v1185, %v1184
      %vm1194 = vcmask 523264
      %v1196 = vsel %vm1194, %v1157, 0
      %1198 = vmatpush.bf16.msra.mxu0 0
      %1199 = vmatpush.bf16.msra.mxu0 0
      %1200 = vmatpush.bf16.msra.mxu0 0
      %1201 = vmatpush.bf16.msra.mxu0 0
      %1202 = vmatpush.bf16.msra.mxu0 %v1189
      %1203 = vmatpush.bf16.msra.mxu0 %v1188
      %1204 = vmatpush.bf16.msra.mxu0 %v1187
      %1205 = vmatpush.bf16.msra.mxu0 %v1186
      %1206 = vmatmul.bf16.gmra.mxu0 %v1196
      %v1207 = vpop.f32.mrf.mxu0
      %v1208 = vadd.f32 %v1168, %v1207
      %v1209 = vpop.f32.mrf.mxu0
      %1210 = vdwg.mxu0
      %v1211 = vadd.f32 %v1208, %v1110
      %v1212 = vld [vmem:[%s807] sm:$0x1]
      %v1213 = vld [vmem:[%s810] sm:$0x1]
      %v1214 = vsel %vm886, %v1211, 0.0
      %1215 = vadd.xlane.f32.xlu0 %v1214
      %v1216 = vpop.xlane.xlu0 %1215
      %v1217 = vmul.f32 %v1216, %v1083
      %v1218 = vsub.f32 %v1211, %v1217
      %v1219 = vmul.f32 %v1218, %v1218
      %v1220 = vsel %vm886, %v1219, 0.0
      %1221 = vadd.xlane.f32.xlu0 %v1220
      %v1222 = vpop.xlane.xlu0 %1221
      %v1223 = vmul.f32 %v1222, %v1083
      %v1224 = vadd.f32 %v1223, 1e-05
      %v1225 = vrsqrt.pop %v1224
      %v1226 = vmul.f32 %v1225, %v1224
      %v1227 = vmul.f32 %v1226, %v1225
      %v1228 = vmul.f32 0.5, %v1227
      %v1229 = vsub.f32 1.5, %v1228
      %v1230 = vmul.f32 %v1225, %v1229
      %vm1231 = vweird.f32 %v1224
      %vm1232 = vweird.f32 %v1225
      %vm1233 = vmor %vm1231, %vm1232
      %v1234 = vsel %vm1233, %v1225, %v1230
      %v1235 = vmul.f32 %v1218, %v1234
      %v1237 = vperm.slane %v1212, 0
      %v1239 = vmul.f32 %v1235, %v1237
      %v1241 = vperm.slane %v1213, 0
      %v1243 = vadd.f32 %v1239, %v1241
      %1244 = vst.msk [vmem:[#allocation2] sm:$0xff] %vm886, %v1243
      %p1245 = scmp.eq.s32.totalorder %s35, 1
      // Predicated region
      $region101: #{roberta_for_latent_forward.1} parent=95 // pred_check
        %p1246 = pneg %p1245
      $region102: #{roberta_for_latent_forward.1} parent=95 // pred_check_branch
        %1248 = sbr.rel (%p1246) target = $region104
      $region103: #{roberta_for_latent_forward.1} parent=95 // pred_region
        %v1249 = vld [vmem:[%s16] sm:$0x1]
        %v1250 = vld [vmem:[%s17] sm:$0x1]
        %vm1251 = vcmask 253952
        %v1252 = vsel %vm1251, %v1243, 0.0
        %1253 = vadd.xlane.f32.xlu0 %v1252
        %v1254 = vpop.xlane.xlu0 %1253
        %v1255 = vmul.f32 %v1254, %v1083
        %v1256 = vsub.f32 %v1243, %v1255
        %v1257 = vmul.f32 %v1256, %v1256
        %v1258 = vsel %vm1251, %v1257, 0.0
        %1259 = vadd.xlane.f32.xlu0 %v1258
        %v1260 = vpop.xlane.xlu0 %1259
        %v1261 = vmul.f32 %v1260, %v1083
        %v1262 = vadd.f32 %v1261, 1e-05
        %v1263 = vrsqrt.pop %v1262
        %v1264 = vmul.f32 %v1263, %v1262
        %v1265 = vmul.f32 %v1264, %v1263
        %v1266 = vmul.f32 0.5, %v1265
        %v1267 = vsub.f32 1.5, %v1266
        %v1268 = vmul.f32 %v1263, %v1267
        %vm1269 = vweird.f32 %v1262
        %vm1270 = vweird.f32 %v1263
        %vm1271 = vmor %vm1269, %vm1270
        %v1272 = vsel %vm1271, %v1263, %v1268
        %v1273 = vmul.f32 %v1256, %v1272
        %v1274 = vmul.f32 %v1273, %v1249
        %v1275 = vadd.f32 %v1274, %v1250
        %v1276 = vpack.c.bf16 %v1275, %v1275
        %v1277 = vld [vmem:[%s18] sm:$0xf]
        %v1278 = vld [vmem:[%s18 + $0x4] sm:$0xf]
        %v1279 = vld [vmem:[%s18 + $0x8] sm:$0xf]
        %v1280 = vld [vmem:[%s18 + $0xc] sm:$0xf]
        %v1285 = vunpack.c.l.b16 %v1277
        %v1286 = vunpack.c.l.b16 %v1278
        %v1287 = vunpack.c.l.b16 %v1279
        %v1288 = vunpack.c.l.b16 %v1280
        %v1289 = vpack.c.b16 %v1286, %v1285
        %v1290 = vpack.c.b16 %v1288, %v1287
        %v1294 = vsel %vm886, %v1276, 0
        %1296 = vmatpush.bf16.msra.mxu0 0
        %1297 = vmatpush.bf16.msra.mxu0 0
        %1298 = vmatpush.bf16.msra.mxu0 0
        %1299 = vmatpush.bf16.msra.mxu0 0
        %1300 = vmatpush.bf16.msra.mxu0 0
        %1301 = vmatpush.bf16.msra.mxu0 0
        %1302 = vmatpush.bf16.msra.mxu0 %v1290
        %1303 = vmatpush.bf16.msra.mxu0 %v1289
        %1304 = vmatmul.bf16.gmra.mxu0 %v1294
        %v1305 = vpop.f32.mrf.mxu0
        %v1306 = vadd.f32 0.0, %v1305
        %v1307 = vpop.f32.mrf.mxu0
        %1308 = vdwg.mxu0
        %1310 = vrot.lane.b32.xlu0 %v1306, 32
        %v1311 = vpop.permute.xlu0 %1310
        %v1313 = vsel %vm886, %v1275, %v1311
        %vm1314 = vcmask 516096
        %1315 = vst.msk [vmem:[%s813] sm:$0x1] %vm1314, %v1313
      $region104: #{roberta_for_latent_forward.1} parent=95 // pred_fallthru
        _
      %p1316 = scmp.lt.s32.totalorder %s34, 1
      %s1317 = scalar_select %p1316, %s34, 1
      %s1318 = scalar_lea.vmem %s19, %s1317
      // Predicated region
      $region105: #{roberta_for_latent_forward.1} parent=95 // pred_check
        %p1319 = pneg %p529
      $region106: #{roberta_for_latent_forward.1} parent=95 // pred_check_branch
        %1321 = sbr.rel (%p1319) target = $region108
      $region107: #{roberta_for_latent_forward.1} parent=95 // pred_region
        _
      $region108: #{roberta_for_latent_forward.1} parent=95 // pred_fallthru
        _
    $region96: #{roberta_for_latent_forward.1} parent=5 // pred_fallthru
      _
    %p1322 = scmp.le.s32.totalorder 2, %s25
    // Predicated region
    $region109: #{roberta_for_latent_forward.1} parent=5 // pred_check
      %p1323 = pneg %p1322
    $region110: #{roberta_for_latent_forward.1} parent=5 // pred_check_branch
      %1325 = sbr.rel (%p1323) target = $region112
    $region111: #{roberta_for_latent_forward.1} parent=5 // pred_region
      %s1326 = ssub.s32 %s25, 2
      // Predicated region
      $region113: #{roberta_for_latent_forward.1} parent=111 // pred_check
        %p1327 = pneg %p535
      $region114: #{roberta_for_latent_forward.1} parent=111 // pred_check_branch
        %1329 = sbr.rel (%p1327) target = $region116
      $region115: #{roberta_for_latent_forward.1} parent=111 // pred_region
        %p1330 = scmp.lt.s32.totalorder %s36, 1
        %s1331 = scalar_select %p1330, %s36, 1
        %s1332 = scalar_lea.vmem %s19, %s1331
      $region116: #{roberta_for_latent_forward.1} parent=111 // pred_fallthru
        _
    $region112: #{roberta_for_latent_forward.1} parent=5 // pred_fallthru
      _
  $region6: #{roberta_for_latent_forward.1} parent=0 // loop_footer
    %s29 = sadd.s32 1, %s25
  $region7: #{roberta_for_latent_forward.1} parent=0 // loop_footer_branch
    %24 = sbr.rel target = $region3
  $region8: #{roberta_for_latent_forward.1} parent=0 // loop_exit
    _

</llo_original>
